<compile_context>
chip_gen: v7x
topology: tpu7x:2x2x1
jax: 0.10.0
libtpu: 0.0.40
codegen_flags: <defaults>
</compile_context>

<pallas_src>
import math
from functools import partial

import jax
import jax.numpy as jnp
import numpy as np
from jax import lax
from jax.experimental import pallas as pl
from jax.experimental.pallas import tpu as pltpu


def _round_up(x, m):
    return ((x + m - 1) // m) * m


# ----------------------------------------------------------------------------
# Pallas kernel.
#   f_ref    : (Sp, Dp)  gathered + zero-padded sampled features (resident)
#   feat_ref : (tm, Dp)  per-tile features (streamed)
#   wq/bq    : (2,Dp,Dp) / (2,1,Dp)   fc_alpha  [layer1, layer2]
#   wkv1/bkv1: (Dp,2Dp)  / (1,2Dp)    fc_beta.l1 | fc_omega.l1 (stacked)
#   wkv2/bkv2: (2,Dp,Dp) / (2,1,Dp)   [fc_beta.l2, fc_omega.l2]
#   out_ref  : (tm, 2*Dp)
# All weights pre-transposed to (in, out); padded rows/cols/bias lanes are 0.
# ----------------------------------------------------------------------------
def _global_attention_kernel(f_ref, feat_ref, wq_ref, bq_ref, wkv1_ref, bkv1_ref,
                             wkv2_ref, bkv2_ref, out_ref, *, d_model, n_valid):
    d_pad = feat_ref.shape[1]
    s_pad = f_ref.shape[0]
    scale = 1.0 / math.sqrt(float(d_model))

    feat = feat_ref[...]                                                 # (tm, Dp)

    # q = fc_alpha(features_tile)
    h = jnp.dot(feat, wq_ref[0], preferred_element_type=jnp.float32) + bq_ref[0]
    h = jnp.maximum(h, 0.0)
    q = jnp.dot(h, wq_ref[1], preferred_element_type=jnp.float32) + bq_ref[1]

    # k = fc_beta(f), v = fc_omega(f); first layers fused into a single matmul.
    fs = f_ref[...]                                                      # (Sp, Dp)
    hkv = jnp.dot(fs, wkv1_ref[...], preferred_element_type=jnp.float32) + bkv1_ref[...]
    hkv = jnp.maximum(hkv, 0.0)                                          # (Sp, 2*Dp)
    k = jnp.dot(hkv[:, :d_pad], wkv2_ref[0],
                preferred_element_type=jnp.float32) + bkv2_ref[0]        # (Sp, Dp)
    v = jnp.dot(hkv[:, d_pad:], wkv2_ref[1],
                preferred_element_type=jnp.float32) + bkv2_ref[1]        # (Sp, Dp)

    # Padded sample rows went through the biased MLP, so zero their v rows;
    # then padded score columns contribute exactly nothing to res.
    if s_pad > n_valid:
        rows = lax.broadcasted_iota(jnp.int32, (s_pad, d_pad), 0)
        v = jnp.where(rows < n_valid, v, 0.0)

    # w = q @ k.T / sqrt(d_model): contract dim 1 with dim 1 (no transpose).
    w = lax.dot_general(q, k, (((1,), (1,)), ((), ())),
                        preferred_element_type=jnp.float32) * scale      # (tm, Sp)
    res = jnp.dot(w, v, preferred_element_type=jnp.float32)              # (tm, Dp)

    # concat([res, features], -1) as two 128-lane-aligned slice stores.
    out_ref[:, :d_pad] = res
    out_ref[:, d_pad:] = feat


def global_attention_pallas(features, idx, packed, *, tm_max=256):
    """features: (N, D) f32, idx: (S,) int, packed: lane-padded packed params."""
    n, d = features.shape
    s = int(idx.shape[0])
    d_pad = packed["wq"].shape[-1]
    s_pad = _round_up(s, 128)

    # Tiny S-row gather + zero-pad to (Sp, Dp).
    f = jnp.take(features, idx.astype(jnp.int32), axis=0)
    f_pad = jnp.zeros((s_pad, d_pad), jnp.float32).at[:s, :d].set(f)

    # Row tiling + zero-pad features to (Np, Dp).
    n_pad = _round_up(n, 8)
    tm = n_pad if n_pad <= tm_max else tm_max
    n_pad = _round_up(n_pad, tm)
    feats = jnp.zeros((n_pad, d_pad), jnp.float32).at[:n, :d].set(features)

    kernel = partial(_global_attention_kernel, d_model=d, n_valid=s)

    out = pl.pallas_call(
        kernel,
        out_shape=jax.ShapeDtypeStruct((n_pad, 2 * d_pad), jnp.float32),
        grid=(n_pad // tm,),
        in_specs=[
            pl.BlockSpec((s_pad, d_pad), lambda i: (0, 0)),           # f (sampled), resident
            pl.BlockSpec((tm, d_pad), lambda i: (i, 0)),              # features, streamed
            pl.BlockSpec((2, d_pad, d_pad), lambda i: (0, 0, 0)),     # fc_alpha W
            pl.BlockSpec((2, 1, d_pad), lambda i: (0, 0, 0)),         # fc_alpha b
            pl.BlockSpec((d_pad, 2 * d_pad), lambda i: (0, 0)),       # beta.l1 | omega.l1 W
            pl.BlockSpec((1, 2 * d_pad), lambda i: (0, 0)),           # beta.l1 | omega.l1 b
            pl.BlockSpec((2, d_pad, d_pad), lambda i: (0, 0, 0)),     # beta.l2, omega.l2 W
            pl.BlockSpec((2, 1, d_pad), lambda i: (0, 0, 0)),         # beta.l2, omega.l2 b
        ],
        out_specs=pl.BlockSpec((tm, 2 * d_pad), lambda i: (i, 0)),
        compiler_params=pltpu.CompilerParams(
            dimension_semantics=("parallel",),      # no cross-step state -> megacore-shardable
            vmem_limit_bytes=32 * 1024 * 1024,      # explicit; safe on v5e/v6e/v7x
        ),
    )(f_pad, feats, packed["wq"], packed["bq"], packed["wkv1"], packed["bkv1"],
      packed["wkv2"], packed["bkv2"])

    # Drop lane padding: real lanes of each half, re-concatenated to (N, 2D).
    return jnp.concatenate([out[:n, :d], out[:n, d_pad:d_pad + d]], axis=-1)


# ----------------------------------------------------------------------------
# Glue: furthest point sampling.
# TODO(synk): FPS is inherently sequential / data-dependent; kept as plain-JAX
#             fori_loop glue (jitted together with the kernel) rather than Pallas.
# ----------------------------------------------------------------------------
def furthest_point_sample(xyz, n_sample):
    """xyz: (N, 3) f32 -> idx: (n_sample,) i32. Starts at index 0 (pointnet2 semantics)."""
    n = xyz.shape[0]

    def body(i, carry):
        dist, idx, farthest = carry
        idx = idx.at[i].set(farthest)
        centroid = xyz[farthest]
        d = jnp.sum((xyz - centroid) ** 2, axis=-1)
        dist = jnp.minimum(dist, d)
        farthest = jnp.argmax(dist).astype(jnp.int32)
        return dist, idx, farthest

    dist0 = jnp.full((n,), 1e10, dtype=jnp.float32)
    idx0 = jnp.zeros((n_sample,), dtype=jnp.int32)
    _, idx, _ = lax.fori_loop(0, n_sample, body, (dist0, idx0, jnp.int32(0)))
    return idx


# ----------------------------------------------------------------------------
# Parameter init (synthetic, unpadded, (in, out) layout) + lane-padded packing.
# ----------------------------------------------------------------------------
def init_params(key, d_model):
    keys = jax.random.split(key, 12)
    bound = 1.0 / math.sqrt(d_model)

    def lin(kw, kb):
        w = jax.random.uniform(kw, (d_model, d_model), jnp.float32, -bound, bound)
        b = jax.random.uniform(kb, (d_model,), jnp.float32, -bound, bound)
        return w, b

    names = ["alpha1", "alpha2", "beta1", "beta2", "omega1", "omega2"]
    return {name: lin(keys[2 * i], keys[2 * i + 1]) for i, name in enumerate(names)}


def pack_params(params, d_model):
    d_pad = _round_up(d_model, 128)

    def padw(w):
        return jnp.zeros((d_pad, d_pad), jnp.float32).at[:d_model, :d_model].set(w)

    def padb(b):
        return jnp.zeros((1, d_pad), jnp.float32).at[0, :d_model].set(b)

    return {
        "wq": jnp.stack([padw(params["alpha1"][0]), padw(params["alpha2"][0])]),
        "bq": jnp.stack([padb(params["alpha1"][1]), padb(params["alpha2"][1])]),
        "wkv1": jnp.concatenate([padw(params["beta1"][0]), padw(params["omega1"][0])], axis=1),
        "bkv1": jnp.concatenate([padb(params["beta1"][1]), padb(params["omega1"][1])], axis=1),
        "wkv2": jnp.stack([padw(params["beta2"][0]), padw(params["omega2"][0])]),
        "bkv2": jnp.stack([padb(params["beta2"][1]), padb(params["omega2"][1])]),
    }


# ----------------------------------------------------------------------------
# Full forward (single jit: FPS + gather + fused attention kernel) + pure-JAX ref.
# ----------------------------------------------------------------------------
@partial(jax.jit, static_argnums=(2,))
def global_attention_forward(p_xyz, features, n_sample, packed):
    idx = furthest_point_sample(p_xyz, n_sample)
    return global_attention_pallas(features, idx, packed)


def global_attention_reference(p_xyz, features, n_sample, params):
    idx = furthest_point_sample(p_xyz, n_sample)
    f = jnp.take(features, idx, axis=0)

    def mlp(x, w1, b1, w2, b2):
        return jnp.maximum(x @ w1 + b1, 0.0) @ w2 + b2

    q = mlp(features, *params["alpha1"], *params["alpha2"])
    k = mlp(f, *params["beta1"], *params["beta2"])
    v = mlp(f, *params["omega1"], *params["omega2"])
    w = (q @ k.T) / np.sqrt(k.shape[-1])
    return jnp.concatenate([w @ v, features], axis=-1)


if __name__ == "__main__":
    key = jax.random.PRNGKey(0)
    k_xyz, k_feat, k_par = jax.random.split(key, 3)

    N = 64          # number of points
    d_model = 32    # feature width
    n_sample = 16   # FPS samples

    p_xyz = jax.random.normal(k_xyz, (N, 3), dtype=jnp.float32)
    features = jax.random.normal(k_feat, (N, d_model), dtype=jnp.float32)
    params = init_params(k_par, d_model)
    packed = pack_params(params, d_model)

    out = jax.block_until_ready(global_attention_forward(p_xyz, features, n_sample, packed))
    ref = jax.block_until_ready(global_attention_reference(p_xyz, features, n_sample, params))

    assert out.shape == (N, 2 * d_model)
    np.testing.assert_allclose(np.asarray(out), np.asarray(ref), rtol=2e-4, atol=2e-4)

    print("KERNEL_OK")
</pallas_src>

<mosaic_0001>
module attributes {stable_mosaic.version = 11 : i64} {
  func.func @_global_attention_kernel(%arg0: i32, %arg1: memref<128x128xf32, #tpu.memory_space<vmem>>, %arg2: memref<64x128xf32, #tpu.memory_space<vmem>>, %arg3: memref<2x128x128xf32, #tpu.memory_space<vmem>>, %arg4: memref<2x1x128xf32, #tpu.memory_space<vmem>>, %arg5: memref<128x256xf32, #tpu.memory_space<vmem>>, %arg6: memref<1x256xf32, #tpu.memory_space<vmem>>, %arg7: memref<2x128x128xf32, #tpu.memory_space<vmem>>, %arg8: memref<2x1x128xf32, #tpu.memory_space<vmem>>, %arg9: memref<64x256xf32, #tpu.memory_space<vmem>>) attributes {dimension_semantics = [#tpu.dimension_semantics<parallel>], iteration_bounds = array<i64: 1>, scalar_prefetch = 0 : i64, scratch_operands = 0 : i64, tpu.core_type = #tpu.core_type<tc>, window_params = [{pipeline_mode = #tpu.pipeline_mode<synchronous>, transform_indices = @transform_0, window_bounds = array<i64: 128, 128>}, {transform_indices = @transform_1, window_bounds = array<i64: 64, 128>}, {pipeline_mode = #tpu.pipeline_mode<synchronous>, transform_indices = @transform_2, window_bounds = array<i64: 2, 128, 128>}, {pipeline_mode = #tpu.pipeline_mode<synchronous>, transform_indices = @transform_3, window_bounds = array<i64: 2, 1, 128>}, {pipeline_mode = #tpu.pipeline_mode<synchronous>, transform_indices = @transform_4, window_bounds = array<i64: 128, 256>}, {pipeline_mode = #tpu.pipeline_mode<synchronous>, transform_indices = @transform_5, window_bounds = array<i64: 1, 256>}, {pipeline_mode = #tpu.pipeline_mode<synchronous>, transform_indices = @transform_6, window_bounds = array<i64: 2, 128, 128>}, {pipeline_mode = #tpu.pipeline_mode<synchronous>, transform_indices = @transform_7, window_bounds = array<i64: 2, 1, 128>}, {transform_indices = @transform_8, window_bounds = array<i64: 64, 256>}]} {
    %c0 = arith.constant 0 : index
    %c0_0 = arith.constant 0 : index
    %0 = vector.load %arg2[%c0, %c0_0] : memref<64x128xf32, #tpu.memory_space<vmem>>, vector<64x128xf32>
    %c0_1 = arith.constant 0 : index
    %c0_2 = arith.constant 0 : index
    %c0_3 = arith.constant 0 : index
    %1 = vector.load %arg3[%c0_1, %c0_2, %c0_3] : memref<2x128x128xf32, #tpu.memory_space<vmem>>, vector<1x128x128xf32>
    %2 = vector.shape_cast %1 : vector<1x128x128xf32> to vector<128x128xf32>
    %cst = arith.constant dense<0.000000e+00> : vector<64x128xf32>
    %3 = tpu.matmul %0, %2, %cst {dimension_numbers = #tpu.dot_dimension_numbers<[1], [0], [0], [1], [0, 0, 1, 1], [], []>} : vector<64x128xf32>, vector<128x128xf32>, vector<64x128xf32> -> vector<64x128xf32>
    %c0_4 = arith.constant 0 : index
    %c0_5 = arith.constant 0 : index
    %c0_6 = arith.constant 0 : index
    %4 = vector.load %arg4[%c0_4, %c0_5, %c0_6] : memref<2x1x128xf32, #tpu.memory_space<vmem>>, vector<1x1x128xf32>
    %5 = vector.shape_cast %4 : vector<1x1x128xf32> to vector<1x128xf32>
    %6 = vector.broadcast %5 : vector<1x128xf32> to vector<64x128xf32>
    %7 = arith.addf %3, %6 : vector<64x128xf32>
    %cst_7 = arith.constant 0.000000e+00 : f32
    %8 = vector.broadcast %cst_7 : f32 to vector<64x128xf32>
    %9 = arith.maximumf %7, %8 : vector<64x128xf32>
    %c1 = arith.constant 1 : index
    %c0_8 = arith.constant 0 : index
    %c0_9 = arith.constant 0 : index
    %10 = vector.load %arg3[%c1, %c0_8, %c0_9] : memref<2x128x128xf32, #tpu.memory_space<vmem>>, vector<1x128x128xf32>
    %11 = vector.shape_cast %10 : vector<1x128x128xf32> to vector<128x128xf32>
    %cst_10 = arith.constant dense<0.000000e+00> : vector<64x128xf32>
    %12 = tpu.matmul %9, %11, %cst_10 {dimension_numbers = #tpu.dot_dimension_numbers<[1], [0], [0], [1], [0, 0, 1, 1], [], []>} : vector<64x128xf32>, vector<128x128xf32>, vector<64x128xf32> -> vector<64x128xf32>
    %c1_11 = arith.constant 1 : index
    %c0_12 = arith.constant 0 : index
    %c0_13 = arith.constant 0 : index
    %13 = vector.load %arg4[%c1_11, %c0_12, %c0_13] : memref<2x1x128xf32, #tpu.memory_space<vmem>>, vector<1x1x128xf32>
    %14 = vector.shape_cast %13 : vector<1x1x128xf32> to vector<1x128xf32>
    %15 = vector.broadcast %14 : vector<1x128xf32> to vector<64x128xf32>
    %16 = arith.addf %12, %15 : vector<64x128xf32>
    %c0_14 = arith.constant 0 : index
    %c0_15 = arith.constant 0 : index
    %17 = vector.load %arg1[%c0_14, %c0_15] : memref<128x128xf32, #tpu.memory_space<vmem>>, vector<128x128xf32>
    %c0_16 = arith.constant 0 : index
    %c0_17 = arith.constant 0 : index
    %18 = vector.load %arg5[%c0_16, %c0_17] : memref<128x256xf32, #tpu.memory_space<vmem>>, vector<128x256xf32>
    %cst_18 = arith.constant dense<0.000000e+00> : vector<128x256xf32>
    %19 = tpu.matmul %17, %18, %cst_18 {dimension_numbers = #tpu.dot_dimension_numbers<[1], [0], [0], [1], [0, 0, 1, 1], [], []>} : vector<128x128xf32>, vector<128x256xf32>, vector<128x256xf32> -> vector<128x256xf32>
    %c0_19 = arith.constant 0 : index
    %c0_20 = arith.constant 0 : index
    %20 = vector.load %arg6[%c0_19, %c0_20] : memref<1x256xf32, #tpu.memory_space<vmem>>, vector<1x256xf32>
    %21 = vector.broadcast %20 : vector<1x256xf32> to vector<128x256xf32>
    %22 = arith.addf %19, %21 : vector<128x256xf32>
    %cst_21 = arith.constant 0.000000e+00 : f32
    %23 = vector.broadcast %cst_21 : f32 to vector<128x256xf32>
    %24 = arith.maximumf %22, %23 : vector<128x256xf32>
    %25 = vector.extract_strided_slice %24 {offsets = [0, 0], sizes = [128, 128], strides = [1, 1]} : vector<128x256xf32> to vector<128x128xf32>
    %c0_22 = arith.constant 0 : index
    %c0_23 = arith.constant 0 : index
    %c0_24 = arith.constant 0 : index
    %26 = vector.load %arg7[%c0_22, %c0_23, %c0_24] : memref<2x128x128xf32, #tpu.memory_space<vmem>>, vector<1x128x128xf32>
    %27 = vector.shape_cast %26 : vector<1x128x128xf32> to vector<128x128xf32>
    %cst_25 = arith.constant dense<0.000000e+00> : vector<128x128xf32>
    %28 = tpu.matmul %25, %27, %cst_25 {dimension_numbers = #tpu.dot_dimension_numbers<[1], [0], [0], [1], [0, 0, 1, 1], [], []>} : vector<128x128xf32>, vector<128x128xf32>, vector<128x128xf32> -> vector<128x128xf32>
    %c0_26 = arith.constant 0 : index
    %c0_27 = arith.constant 0 : index
    %c0_28 = arith.constant 0 : index
    %29 = vector.load %arg8[%c0_26, %c0_27, %c0_28] : memref<2x1x128xf32, #tpu.memory_space<vmem>>, vector<1x1x128xf32>
    %30 = vector.shape_cast %29 : vector<1x1x128xf32> to vector<1x128xf32>
    %31 = vector.broadcast %30 : vector<1x128xf32> to vector<128x128xf32>
    %32 = arith.addf %28, %31 : vector<128x128xf32>
    %33 = vector.extract_strided_slice %24 {offsets = [0, 128], sizes = [128, 128], strides = [1, 1]} : vector<128x256xf32> to vector<128x128xf32>
    %c1_29 = arith.constant 1 : index
    %c0_30 = arith.constant 0 : index
    %c0_31 = arith.constant 0 : index
    %34 = vector.load %arg7[%c1_29, %c0_30, %c0_31] : memref<2x128x128xf32, #tpu.memory_space<vmem>>, vector<1x128x128xf32>
    %35 = vector.shape_cast %34 : vector<1x128x128xf32> to vector<128x128xf32>
    %cst_32 = arith.constant dense<0.000000e+00> : vector<128x128xf32>
    %36 = tpu.matmul %33, %35, %cst_32 {dimension_numbers = #tpu.dot_dimension_numbers<[1], [0], [0], [1], [0, 0, 1, 1], [], []>} : vector<128x128xf32>, vector<128x128xf32>, vector<128x128xf32> -> vector<128x128xf32>
    %c1_33 = arith.constant 1 : index
    %c0_34 = arith.constant 0 : index
    %c0_35 = arith.constant 0 : index
    %37 = vector.load %arg8[%c1_33, %c0_34, %c0_35] : memref<2x1x128xf32, #tpu.memory_space<vmem>>, vector<1x1x128xf32>
    %38 = vector.shape_cast %37 : vector<1x1x128xf32> to vector<1x128xf32>
    %39 = vector.broadcast %38 : vector<1x128xf32> to vector<128x128xf32>
    %40 = arith.addf %36, %39 : vector<128x128xf32>
    %41 = tpu.iota {dimensions = array<i32: 0>} : vector<128x128xi32>
    %c16_i32 = arith.constant 16 : i32
    %42 = vector.broadcast %c16_i32 : i32 to vector<128x128xi32>
    %43 = arith.cmpi slt, %41, %42 : vector<128x128xi32>
    %cst_36 = arith.constant 0.000000e+00 : f32
    %44 = vector.broadcast %cst_36 : f32 to vector<128x128xf32>
    %45 = arith.select %43, %40, %44 : vector<128x128xi1>, vector<128x128xf32>
    %cst_37 = arith.constant dense<0.000000e+00> : vector<64x128xf32>
    %46 = tpu.matmul %16, %32, %cst_37 {dimension_numbers = #tpu.dot_dimension_numbers<[1], [1], [0], [0], [0, 0, 1, 0], [], []>} : vector<64x128xf32>, vector<128x128xf32>, vector<64x128xf32> -> vector<64x128xf32>
    %cst_38 = arith.constant 0.176776692 : f32
    %47 = vector.broadcast %cst_38 : f32 to vector<64x128xf32>
    %48 = arith.mulf %46, %47 : vector<64x128xf32>
    %cst_39 = arith.constant dense<0.000000e+00> : vector<64x128xf32>
    %49 = tpu.matmul %48, %45, %cst_39 {dimension_numbers = #tpu.dot_dimension_numbers<[1], [0], [0], [1], [0, 0, 1, 1], [], []>} : vector<64x128xf32>, vector<128x128xf32>, vector<64x128xf32> -> vector<64x128xf32>
    %c0_40 = arith.constant 0 : index
    %c0_41 = arith.constant 0 : index
    %50 = vector.load %arg9[%c0_40, %c0_41] : memref<64x256xf32, #tpu.memory_space<vmem>>, vector<64x128xf32>
    tpu.vector_store %arg9[%c0_40, %c0_41], %49 {strides = array<i32>} : memref<64x256xf32, #tpu.memory_space<vmem>>, vector<64x128xf32>,
    %c0_42 = arith.constant 0 : index
    %c128 = arith.constant 128 : index
    %51 = vector.load %arg9[%c0_42, %c128] : memref<64x256xf32, #tpu.memory_space<vmem>>, vector<64x128xf32>
    tpu.vector_store %arg9[%c0_42, %c128], %0 {strides = array<i32>} : memref<64x256xf32, #tpu.memory_space<vmem>>, vector<64x128xf32>,
    return
  }
  func.func @transform_0(%arg0: i32) -> (i32, i32) {
    %c0_i32 = arith.constant 0 : i32
    %c0_i32_0 = arith.constant 0 : i32
    %c0_i32_1 = arith.constant 0 : i32
    return %c0_i32, %c0_i32_0 : i32, i32
  }
  func.func @transform_1(%arg0: i32) -> (i32, i32) {
    %c0_i32 = arith.constant 0 : i32
    %c0_i32_0 = arith.constant 0 : i32
    return %arg0, %c0_i32 : i32, i32
  }
  func.func @transform_2(%arg0: i32) -> (i32, i32, i32) {
    %c0_i32 = arith.constant 0 : i32
    %c0_i32_0 = arith.constant 0 : i32
    %c0_i32_1 = arith.constant 0 : i32
    %c0_i32_2 = arith.constant 0 : i32
    return %c0_i32, %c0_i32_0, %c0_i32_1 : i32, i32, i32
  }
  func.func @transform_3(%arg0: i32) -> (i32, i32, i32) {
    %c0_i32 = arith.constant 0 : i32
    %c0_i32_0 = arith.constant 0 : i32
    %c0_i32_1 = arith.constant 0 : i32
    %c0_i32_2 = arith.constant 0 : i32
    return %c0_i32, %c0_i32_0, %c0_i32_1 : i32, i32, i32
  }
  func.func @transform_4(%arg0: i32) -> (i32, i32) {
    %c0_i32 = arith.constant 0 : i32
    %c0_i32_0 = arith.constant 0 : i32
    %c0_i32_1 = arith.constant 0 : i32
    return %c0_i32, %c0_i32_0 : i32, i32
  }
  func.func @transform_5(%arg0: i32) -> (i32, i32) {
    %c0_i32 = arith.constant 0 : i32
    %c0_i32_0 = arith.constant 0 : i32
    %c0_i32_1 = arith.constant 0 : i32
    return %c0_i32, %c0_i32_0 : i32, i32
  }
  func.func @transform_6(%arg0: i32) -> (i32, i32, i32) {
    %c0_i32 = arith.constant 0 : i32
    %c0_i32_0 = arith.constant 0 : i32
    %c0_i32_1 = arith.constant 0 : i32
    %c0_i32_2 = arith.constant 0 : i32
    return %c0_i32, %c0_i32_0, %c0_i32_1 : i32, i32, i32
  }
  func.func @transform_7(%arg0: i32) -> (i32, i32, i32) {
    %c0_i32 = arith.constant 0 : i32
    %c0_i32_0 = arith.constant 0 : i32
    %c0_i32_1 = arith.constant 0 : i32
    %c0_i32_2 = arith.constant 0 : i32
    return %c0_i32, %c0_i32_0, %c0_i32_1 : i32, i32, i32
  }
  func.func @transform_8(%arg0: i32) -> (i32, i32) {
    %c0_i32 = arith.constant 0 : i32
    %c0_i32_0 = arith.constant 0 : i32
    return %arg0, %c0_i32 : i32, i32
  }
}

</mosaic_0001>

<llo_original>
// kernel: custom-call
$region0: #{custom-call}
  %s0 = inlined_call_operand.vmem [shape: f32[64], index: 0, kind: output, shape index: {}]

// kernel: global_attention_forward.1
$region0: #{global_attention_forward.1}
  #allocation0 [shape = 'u32[]', space=smem, size = 0x4, offset = 0x4, fixed_abs, tag = 'smem constant byte address 0x4 - core index']
  #allocation1 [shape = 'u32[144,128]{1,0:T(1,128)}', space=vmem, size = 0x12000, scoped, tag = 'internal scratch']
  %s0 = inlined_call_operand.vmem [shape: f32[128,128], index: 0, kind: input, shape index: {}]
  %s1 = inlined_call_operand.vmem [shape: f32[64,128], index: 1, kind: input, shape index: {}]
  %s2 = inlined_call_operand.vmem [shape: f32[2,128,128], index: 2, kind: input, shape index: {}]
  %s3 = inlined_call_operand.vmem [shape: f32[2,1,128], index: 3, kind: input, shape index: {}]
  %s4 = inlined_call_operand.vmem [shape: f32[128,256], index: 4, kind: input, shape index: {}]
  %s5 = inlined_call_operand.vmem [shape: f32[1,256], index: 5, kind: input, shape index: {}]
  %s6 = inlined_call_operand.vmem [shape: f32[2,128,128], index: 6, kind: input, shape index: {}]
  %s7 = inlined_call_operand.vmem [shape: f32[2,1,128], index: 7, kind: input, shape index: {}]
  %s8 = inlined_call_operand.vmem [shape: f32[64,256], index: 8, kind: output, shape index: {}]
  %s9 = sld [smem:[#allocation0]]
  $region42: #{global_attention_forward.1} parent=0
    _
  %s11 = ssub.s32 1, %s9
  %s12 = scalar_select 0, %s11, %s9
  // Predicated region
  $region2: #{global_attention_forward.1} parent=0 // pred_check
    _
  $region3: #{global_attention_forward.1} parent=0 // pred_check_branch
    %14 = sbr.rel (0) target = $region5
  $region4: #{global_attention_forward.1} parent=0 // pred_region
    _
  $region5: #{global_attention_forward.1} parent=0 // pred_fallthru
    _
  // Predicated region
  $region6: #{global_attention_forward.1} parent=0 // pred_check
    _
  $region7: #{global_attention_forward.1} parent=0 // pred_check_branch
    %16 = sbr.rel (0) target = $region9
  $region8: #{global_attention_forward.1} parent=0 // pred_region
    _
  $region9: #{global_attention_forward.1} parent=0 // pred_fallthru
    _
  // Predicated region
  $region10: #{global_attention_forward.1} parent=0 // pred_check
    _
  $region11: #{global_attention_forward.1} parent=0 // pred_check_branch
    %18 = sbr.rel (0) target = $region13
  $region12: #{global_attention_forward.1} parent=0 // pred_region
    _
  $region13: #{global_attention_forward.1} parent=0 // pred_fallthru
    _
  // Predicated region
  $region14: #{global_attention_forward.1} parent=0 // pred_check
    _
  $region15: #{global_attention_forward.1} parent=0 // pred_check_branch
    %20 = sbr.rel (0) target = $region17
  $region16: #{global_attention_forward.1} parent=0 // pred_region
    _
  $region17: #{global_attention_forward.1} parent=0 // pred_fallthru
    _
  // Predicated region
  $region18: #{global_attention_forward.1} parent=0 // pred_check
    _
  $region19: #{global_attention_forward.1} parent=0 // pred_check_branch
    %22 = sbr.rel (0) target = $region21
  $region20: #{global_attention_forward.1} parent=0 // pred_region
    _
  $region21: #{global_attention_forward.1} parent=0 // pred_fallthru
    _
  // Predicated region
  $region22: #{global_attention_forward.1} parent=0 // pred_check
    _
  $region23: #{global_attention_forward.1} parent=0 // pred_check_branch
    %24 = sbr.rel (0) target = $region25
  $region24: #{global_attention_forward.1} parent=0 // pred_region
    _
  $region25: #{global_attention_forward.1} parent=0 // pred_fallthru
    _
  // Predicated region
  $region26: #{global_attention_forward.1} parent=0 // pred_check
    _
  $region27: #{global_attention_forward.1} parent=0 // pred_check_branch
    %26 = sbr.rel (0) target = $region29
  $region28: #{global_attention_forward.1} parent=0 // pred_region
    _
  $region29: #{global_attention_forward.1} parent=0 // pred_fallthru
    _
  // Predicated region
  $region30: #{global_attention_forward.1} parent=0 // pred_check
    _
  $region31: #{global_attention_forward.1} parent=0 // pred_check_branch
    %28 = sbr.rel (0) target = $region33
  $region32: #{global_attention_forward.1} parent=0 // pred_region
    _
  $region33: #{global_attention_forward.1} parent=0 // pred_fallthru
    _
  %v29 = vld [vmem:[%s1] sm:$0xff]
  %v30 = vld [vmem:[%s1 + $0x8] sm:$0xff]
  %v31 = vld [vmem:[%s1 + $0x10] sm:$0xff]
  %v32 = vld [vmem:[%s1 + $0x18] sm:$0xff]
  %v33 = vld [vmem:[%s1 + $0x20] sm:$0xff]
  %v34 = vld [vmem:[%s1 + $0x28] sm:$0xff]
  %v35 = vld [vmem:[%s1 + $0x30] sm:$0xff]
  %v36 = vld [vmem:[%s1 + $0x38] sm:$0xff]
  %v37 = vld [vmem:[%s2] sm:$0xff]
  %v38 = vld [vmem:[%s2 + $0x8] sm:$0xff]
  %v39 = vld [vmem:[%s2 + $0x10] sm:$0xff]
  %v40 = vld [vmem:[%s2 + $0x18] sm:$0xff]
  %v41 = vld [vmem:[%s2 + $0x20] sm:$0xff]
  %v42 = vld [vmem:[%s2 + $0x28] sm:$0xff]
  %v43 = vld [vmem:[%s2 + $0x30] sm:$0xff]
  %v44 = vld [vmem:[%s2 + $0x38] sm:$0xff]
  %v45 = vld [vmem:[%s2 + $0x40] sm:$0xff]
  %v46 = vld [vmem:[%s2 + $0x48] sm:$0xff]
  %v47 = vld [vmem:[%s2 + $0x50] sm:$0xff]
  %v48 = vld [vmem:[%s2 + $0x58] sm:$0xff]
  %v49 = vld [vmem:[%s2 + $0x60] sm:$0xff]
  %v50 = vld [vmem:[%s2 + $0x68] sm:$0xff]
  %v51 = vld [vmem:[%s2 + $0x70] sm:$0xff]
  %v52 = vld [vmem:[%s2 + $0x78] sm:$0xff]
  %v53 = vld [vmem:[%s3] sm:$0x1]
  %v55 = vlaneseq
  %v56 = vshrl.u32 %v55, 7
  %v57 = vsub.s32 0, %v56
  %v58 = vrot.slane %v53, %v57
  %60 = vmatprep.subr.mxu0 0.0
  %61 = vmatpush1.msra.mxu0 %v37
  %62 = vmatprep.subr.mxu0 0.0
  %63 = vmatpush1.msra.mxu0 %v38
  %64 = vmatprep.subr.mxu0 0.0
  %65 = vmatpush1.msra.mxu0 %v39
  %66 = vmatprep.subr.mxu0 0.0
  %67 = vmatpush1.msra.mxu0 %v40
  %68 = vmatprep.subr.mxu0 0.0
  %69 = vmatpush1.msra.mxu0 %v41
  %70 = vmatprep.subr.mxu0 0.0
  %71 = vmatpush1.msra.mxu0 %v42
  %72 = vmatprep.subr.mxu0 0.0
  %73 = vmatpush1.msra.mxu0 %v43
  %74 = vmatprep.subr.mxu0 0.0
  %75 = vmatpush1.msra.mxu0 %v44
  %76 = vmatprep.subr.mxu0 0.0
  %77 = vmatpush1.msra.mxu0 %v45
  %78 = vmatprep.subr.mxu0 0.0
  %79 = vmatpush1.msra.mxu0 %v46
  %80 = vmatprep.subr.mxu0 0.0
  %81 = vmatpush1.msra.mxu0 %v47
  %82 = vmatprep.subr.mxu0 0.0
  %83 = vmatpush1.msra.mxu0 %v48
  %84 = vmatprep.subr.mxu0 0.0
  %85 = vmatpush1.msra.mxu0 %v49
  %86 = vmatprep.subr.mxu0 0.0
  %87 = vmatpush1.msra.mxu0 %v50
  %88 = vmatprep.subr.mxu0 0.0
  %89 = vmatpush1.msra.mxu0 %v51
  %90 = vmatprep.subr.mxu0 0.0
  %91 = vmatpush1.msra.mxu0 %v52
  %92 = vmatprep.subr.mxu0 0.0
  %93 = vmatpush1.msra.mxu0 0.0
  %94 = vmatprep.subr.mxu0 0.0
  %95 = vmatpush1.msra.mxu0 0.0
  %96 = vmatprep.subr.mxu0 0.0
  %97 = vmatpush1.msra.mxu0 0.0
  %98 = vmatprep.subr.mxu0 0.0
  %99 = vmatpush1.msra.mxu0 0.0
  %100 = vmatprep.subr.mxu0 0.0
  %101 = vmatpush1.msra.mxu0 0.0
  %102 = vmatprep.subr.mxu0 0.0
  %103 = vmatpush1.msra.mxu0 0.0
  %104 = vmatprep.subr.mxu0 0.0
  %105 = vmatpush1.msra.mxu0 0.0
  %106 = vmatprep.subr.mxu0 0.0
  %107 = vmatpush1.msra.mxu0 0.0
  %108 = vmatprep.subr.mxu0 0.0
  %109 = vmatpush1.msra.mxu0 0.0
  %110 = vmatprep.subr.mxu0 0.0
  %111 = vmatpush1.msra.mxu0 0.0
  %112 = vmatprep.subr.mxu0 0.0
  %113 = vmatpush1.msra.mxu0 0.0
  %114 = vmatprep.subr.mxu0 0.0
  %115 = vmatpush1.msra.mxu0 0.0
  %116 = vmatprep.subr.mxu0 0.0
  %117 = vmatpush1.msra.mxu0 0.0
  %118 = vmatprep.subr.mxu0 0.0
  %119 = vmatpush1.msra.mxu0 0.0
  %120 = vmatprep.subr.mxu0 0.0
  %121 = vmatpush1.msra.mxu0 0.0
  %122 = vmatprep.subr.mxu0 0.0
  %123 = vmatpush1.msra.mxu0 0.0
  %124 = vmatprep.mubr.f32.mxu0 0.0
  %125 = vmatmul.mubr.f32.gmra.mrb[0].mxu0 %v29
  %v126 = vpop.f32.mrb[0].mxu0
  %v127 = vadd.f32 %v58, %v126
  %v128 = vpop.f32.mrb[0].mxu0
  %129 = vmatprep.mubr.f32.mxu0 0.0
  %130 = vmatmul.mubr.f32.gmra.mrb[0].mxu0 %v30
  %v131 = vpop.f32.mrb[0].mxu0
  %v132 = vadd.f32 %v58, %v131
  %v133 = vpop.f32.mrb[0].mxu0
  %134 = vmatprep.mubr.f32.mxu0 0.0
  %135 = vmatmul.mubr.f32.gmra.mrb[0].mxu0 %v31
  %v136 = vpop.f32.mrb[0].mxu0
  %v137 = vadd.f32 %v58, %v136
  %v138 = vpop.f32.mrb[0].mxu0
  %139 = vmatprep.mubr.f32.mxu0 0.0
  %140 = vmatmul.mubr.f32.gmra.mrb[0].mxu0 %v32
  %v141 = vpop.f32.mrb[0].mxu0
  %v142 = vadd.f32 %v58, %v141
  %v143 = vpop.f32.mrb[0].mxu0
  %144 = vmatprep.mubr.f32.mxu0 0.0
  %145 = vmatmul.mubr.f32.gmra.mrb[0].mxu0 %v33
  %v146 = vpop.f32.mrb[0].mxu0
  %v147 = vadd.f32 %v58, %v146
  %v148 = vpop.f32.mrb[0].mxu0
  %149 = vmatprep.mubr.f32.mxu0 0.0
  %150 = vmatmul.mubr.f32.gmra.mrb[0].mxu0 %v34
  %v151 = vpop.f32.mrb[0].mxu0
  %v152 = vadd.f32 %v58, %v151
  %v153 = vpop.f32.mrb[0].mxu0
  %154 = vmatprep.mubr.f32.mxu0 0.0
  %155 = vmatmul.mubr.f32.gmra.mrb[0].mxu0 %v35
  %v156 = vpop.f32.mrb[0].mxu0
  %v157 = vadd.f32 %v58, %v156
  %v158 = vpop.f32.mrb[0].mxu0
  %159 = vmatprep.mubr.f32.mxu0 0.0
  %160 = vmatmul.mubr.f32.gmra.mrb[0].mxu0 %v36
  %v161 = vpop.f32.mrb[0].mxu0
  %v162 = vadd.f32 %v58, %v161
  %v163 = vpop.f32.mrb[0].mxu0
  %164 = vdwg.mxu0
  %v165 = vmax.f32 %v127, 0.0
  %v166 = vmax.f32 %v132, 0.0
  %v167 = vmax.f32 %v137, 0.0
  %v168 = vmax.f32 %v142, 0.0
  %v169 = vmax.f32 %v147, 0.0
  %v170 = vmax.f32 %v152, 0.0
  %v171 = vmax.f32 %v157, 0.0
  %v172 = vmax.f32 %v162, 0.0
  %s173 = scalar_lea.vmem %s2, 128
  %v174 = vld [vmem:[%s173] sm:$0xff]
  %v175 = vld [vmem:[%s173 + $0x8] sm:$0xff]
  %v176 = vld [vmem:[%s173 + $0x10] sm:$0xff]
  %v177 = vld [vmem:[%s173 + $0x18] sm:$0xff]
  %v178 = vld [vmem:[%s173 + $0x20] sm:$0xff]
  %v179 = vld [vmem:[%s173 + $0x28] sm:$0xff]
  %v180 = vld [vmem:[%s173 + $0x30] sm:$0xff]
  %v181 = vld [vmem:[%s173 + $0x38] sm:$0xff]
  %v182 = vld [vmem:[%s173 + $0x40] sm:$0xff]
  %v183 = vld [vmem:[%s173 + $0x48] sm:$0xff]
  %v184 = vld [vmem:[%s173 + $0x50] sm:$0xff]
  %v185 = vld [vmem:[%s173 + $0x58] sm:$0xff]
  %v186 = vld [vmem:[%s173 + $0x60] sm:$0xff]
  %v187 = vld [vmem:[%s173 + $0x68] sm:$0xff]
  %v188 = vld [vmem:[%s173 + $0x70] sm:$0xff]
  %v189 = vld [vmem:[%s173 + $0x78] sm:$0xff]
  %s190 = scalar_lea.vmem %s3, 1
  %v191 = vld [vmem:[%s190] sm:$0x1]
  %v193 = vlaneseq
  %v194 = vshrl.u32 %v193, 7
  %v195 = vsub.s32 0, %v194
  %v196 = vrot.slane %v191, %v195
  %198 = vmatprep.subr.mxu0 0.0
  %199 = vmatpush1.msra.mxu0 %v174
  %200 = vmatprep.subr.mxu0 0.0
  %201 = vmatpush1.msra.mxu0 %v175
  %202 = vmatprep.subr.mxu0 0.0
  %203 = vmatpush1.msra.mxu0 %v176
  %204 = vmatprep.subr.mxu0 0.0
  %205 = vmatpush1.msra.mxu0 %v177
  %206 = vmatprep.subr.mxu0 0.0
  %207 = vmatpush1.msra.mxu0 %v178
  %208 = vmatprep.subr.mxu0 0.0
  %209 = vmatpush1.msra.mxu0 %v179
  %210 = vmatprep.subr.mxu0 0.0
  %211 = vmatpush1.msra.mxu0 %v180
  %212 = vmatprep.subr.mxu0 0.0
  %213 = vmatpush1.msra.mxu0 %v181
  %214 = vmatprep.subr.mxu0 0.0
  %215 = vmatpush1.msra.mxu0 %v182
  %216 = vmatprep.subr.mxu0 0.0
  %217 = vmatpush1.msra.mxu0 %v183
  %218 = vmatprep.subr.mxu0 0.0
  %219 = vmatpush1.msra.mxu0 %v184
  %220 = vmatprep.subr.mxu0 0.0
  %221 = vmatpush1.msra.mxu0 %v185
  %222 = vmatprep.subr.mxu0 0.0
  %223 = vmatpush1.msra.mxu0 %v186
  %224 = vmatprep.subr.mxu0 0.0
  %225 = vmatpush1.msra.mxu0 %v187
  %226 = vmatprep.subr.mxu0 0.0
  %227 = vmatpush1.msra.mxu0 %v188
  %228 = vmatprep.subr.mxu0 0.0
  %229 = vmatpush1.msra.mxu0 %v189
  %230 = vmatprep.subr.mxu0 0.0
  %231 = vmatpush1.msra.mxu0 0.0
  %232 = vmatprep.subr.mxu0 0.0
  %233 = vmatpush1.msra.mxu0 0.0
  %234 = vmatprep.subr.mxu0 0.0
  %235 = vmatpush1.msra.mxu0 0.0
  %236 = vmatprep.subr.mxu0 0.0
  %237 = vmatpush1.msra.mxu0 0.0
  %238 = vmatprep.subr.mxu0 0.0
  %239 = vmatpush1.msra.mxu0 0.0
  %240 = vmatprep.subr.mxu0 0.0
  %241 = vmatpush1.msra.mxu0 0.0
  %242 = vmatprep.subr.mxu0 0.0
  %243 = vmatpush1.msra.mxu0 0.0
  %244 = vmatprep.subr.mxu0 0.0
  %245 = vmatpush1.msra.mxu0 0.0
  %246 = vmatprep.subr.mxu0 0.0
  %247 = vmatpush1.msra.mxu0 0.0
  %248 = vmatprep.subr.mxu0 0.0
  %249 = vmatpush1.msra.mxu0 0.0
  %250 = vmatprep.subr.mxu0 0.0
  %251 = vmatpush1.msra.mxu0 0.0
  %252 = vmatprep.subr.mxu0 0.0
  %253 = vmatpush1.msra.mxu0 0.0
  %254 = vmatprep.subr.mxu0 0.0
  %255 = vmatpush1.msra.mxu0 0.0
  %256 = vmatprep.subr.mxu0 0.0
  %257 = vmatpush1.msra.mxu0 0.0
  %258 = vmatprep.subr.mxu0 0.0
  %259 = vmatpush1.msra.mxu0 0.0
  %260 = vmatprep.subr.mxu0 0.0
  %261 = vmatpush1.msra.mxu0 0.0
  %262 = vmatprep.mubr.f32.mxu0 0.0
  %263 = vmatmul.mubr.f32.gmra.mrb[0].mxu0 %v165
  %v264 = vpop.f32.mrb[0].mxu0
  %v265 = vadd.f32 %v196, %v264
  %v266 = vpop.f32.mrb[0].mxu0
  %267 = vmatprep.mubr.f32.mxu0 0.0
  %268 = vmatmul.mubr.f32.gmra.mrb[0].mxu0 %v166
  %v269 = vpop.f32.mrb[0].mxu0
  %v270 = vadd.f32 %v196, %v269
  %v271 = vpop.f32.mrb[0].mxu0
  %272 = vmatprep.mubr.f32.mxu0 0.0
  %273 = vmatmul.mubr.f32.gmra.mrb[0].mxu0 %v167
  %v274 = vpop.f32.mrb[0].mxu0
  %v275 = vadd.f32 %v196, %v274
  %v276 = vpop.f32.mrb[0].mxu0
  %277 = vmatprep.mubr.f32.mxu0 0.0
  %278 = vmatmul.mubr.f32.gmra.mrb[0].mxu0 %v168
  %v279 = vpop.f32.mrb[0].mxu0
  %v280 = vadd.f32 %v196, %v279
  %v281 = vpop.f32.mrb[0].mxu0
  %282 = vmatprep.mubr.f32.mxu0 0.0
  %283 = vmatmul.mubr.f32.gmra.mrb[0].mxu0 %v169
  %v284 = vpop.f32.mrb[0].mxu0
  %v285 = vadd.f32 %v196, %v284
  %v286 = vpop.f32.mrb[0].mxu0
  %287 = vmatprep.mubr.f32.mxu0 0.0
  %288 = vmatmul.mubr.f32.gmra.mrb[0].mxu0 %v170
  %v289 = vpop.f32.mrb[0].mxu0
  %v290 = vadd.f32 %v196, %v289
  %v291 = vpop.f32.mrb[0].mxu0
  %292 = vmatprep.mubr.f32.mxu0 0.0
  %293 = vmatmul.mubr.f32.gmra.mrb[0].mxu0 %v171
  %v294 = vpop.f32.mrb[0].mxu0
  %v295 = vadd.f32 %v196, %v294
  %v296 = vpop.f32.mrb[0].mxu0
  %297 = vmatprep.mubr.f32.mxu0 0.0
  %298 = vmatmul.mubr.f32.gmra.mrb[0].mxu0 %v172
  %v299 = vpop.f32.mrb[0].mxu0
  %v300 = vadd.f32 %v196, %v299
  %v301 = vpop.f32.mrb[0].mxu0
  %302 = vdwg.mxu0
  %v303 = vld [vmem:[%s0] sm:$0xff]
  %v304 = vld [vmem:[%s0 + $0x8] sm:$0xff]
  %v305 = vld [vmem:[%s0 + $0x10] sm:$0xff]
  %v306 = vld [vmem:[%s0 + $0x18] sm:$0xff]
  %v307 = vld [vmem:[%s0 + $0x20] sm:$0xff]
  %v308 = vld [vmem:[%s0 + $0x28] sm:$0xff]
  %v309 = vld [vmem:[%s0 + $0x30] sm:$0xff]
  %v310 = vld [vmem:[%s0 + $0x38] sm:$0xff]
  %v311 = vld [vmem:[%s0 + $0x40] sm:$0xff]
  %v312 = vld [vmem:[%s0 + $0x48] sm:$0xff]
  %v313 = vld [vmem:[%s0 + $0x50] sm:$0xff]
  %v314 = vld [vmem:[%s0 + $0x58] sm:$0xff]
  %v315 = vld [vmem:[%s0 + $0x60] sm:$0xff]
  %v316 = vld [vmem:[%s0 + $0x68] sm:$0xff]
  %v317 = vld [vmem:[%s0 + $0x70] sm:$0xff]
  %v318 = vld [vmem:[%s0 + $0x78] sm:$0xff]
  %v319 = vld [vmem:[%s4] sm:$0xff]
  %v320 = vld [vmem:[%s4 + $0x8] sm:$0xff]
  %v321 = vld [vmem:[%s4 + $0x10] sm:$0xff]
  %v322 = vld [vmem:[%s4 + $0x18] sm:$0xff]
  %v323 = vld [vmem:[%s4 + $0x20] sm:$0xff]
  %v324 = vld [vmem:[%s4 + $0x28] sm:$0xff]
  %v325 = vld [vmem:[%s4 + $0x30] sm:$0xff]
  %v326 = vld [vmem:[%s4 + $0x38] sm:$0xff]
  %v327 = vld [vmem:[%s4 + $0x40] sm:$0xff]
  %v328 = vld [vmem:[%s4 + $0x48] sm:$0xff]
  %v329 = vld [vmem:[%s4 + $0x50] sm:$0xff]
  %v330 = vld [vmem:[%s4 + $0x58] sm:$0xff]
  %v331 = vld [vmem:[%s4 + $0x60] sm:$0xff]
  %v332 = vld [vmem:[%s4 + $0x68] sm:$0xff]
  %v333 = vld [vmem:[%s4 + $0x70] sm:$0xff]
  %v334 = vld [vmem:[%s4 + $0x78] sm:$0xff]
  %v335 = vld [vmem:[%s4 + $0x80] sm:$0xff]
  %v336 = vld [vmem:[%s4 + $0x88] sm:$0xff]
  %v337 = vld [vmem:[%s4 + $0x90] sm:$0xff]
  %v338 = vld [vmem:[%s4 + $0x98] sm:$0xff]
  %v339 = vld [vmem:[%s4 + $0xa0] sm:$0xff]
  %v340 = vld [vmem:[%s4 + $0xa8] sm:$0xff]
  %v341 = vld [vmem:[%s4 + $0xb0] sm:$0xff]
  %v342 = vld [vmem:[%s4 + $0xb8] sm:$0xff]
  %v343 = vld [vmem:[%s4 + $0xc0] sm:$0xff]
  %v344 = vld [vmem:[%s4 + $0xc8] sm:$0xff]
  %v345 = vld [vmem:[%s4 + $0xd0] sm:$0xff]
  %v346 = vld [vmem:[%s4 + $0xd8] sm:$0xff]
  %v347 = vld [vmem:[%s4 + $0xe0] sm:$0xff]
  %v348 = vld [vmem:[%s4 + $0xe8] sm:$0xff]
  %v349 = vld [vmem:[%s4 + $0xf0] sm:$0xff]
  %v350 = vld [vmem:[%s4 + $0xf8] sm:$0xff]
  %v351 = vld [vmem:[%s5] sm:$0x3]
  %v353 = vlaneseq
  %v354 = vshrl.u32 %v353, 7
  %v355 = vsub.s32 0, %v354
  %v356 = vrot.slane %v351, %v355
  %v357 = vlaneseq
  %v358 = vshrl.u32 %v357, 7
  %v359 = vsub.s32 1, %v358
  %v360 = vrot.slane %v351, %v359
  %363 = vmatprep.subr.mxu0 %v320
  %364 = vmatpush1.msra.mxu0 %v319
  %365 = vmatprep.subr.mxu0 %v322
  %366 = vmatpush1.msra.mxu0 %v321
  %367 = vmatprep.subr.mxu0 %v324
  %368 = vmatpush1.msra.mxu0 %v323
  %369 = vmatprep.subr.mxu0 %v326
  %370 = vmatpush1.msra.mxu0 %v325
  %371 = vmatprep.subr.mxu0 %v328
  %372 = vmatpush1.msra.mxu0 %v327
  %373 = vmatprep.subr.mxu0 %v330
  %374 = vmatpush1.msra.mxu0 %v329
  %375 = vmatprep.subr.mxu0 %v332
  %376 = vmatpush1.msra.mxu0 %v331
  %377 = vmatprep.subr.mxu0 %v334
  %378 = vmatpush1.msra.mxu0 %v333
  %379 = vmatprep.subr.mxu0 %v336
  %380 = vmatpush1.msra.mxu0 %v335
  %381 = vmatprep.subr.mxu0 %v338
  %382 = vmatpush1.msra.mxu0 %v337
  %383 = vmatprep.subr.mxu0 %v340
  %384 = vmatpush1.msra.mxu0 %v339
  %385 = vmatprep.subr.mxu0 %v342
  %386 = vmatpush1.msra.mxu0 %v341
  %387 = vmatprep.subr.mxu0 %v344
  %388 = vmatpush1.msra.mxu0 %v343
  %389 = vmatprep.subr.mxu0 %v346
  %390 = vmatpush1.msra.mxu0 %v345
  %391 = vmatprep.subr.mxu0 %v348
  %392 = vmatpush1.msra.mxu0 %v347
  %393 = vmatprep.subr.mxu0 %v350
  %394 = vmatpush1.msra.mxu0 %v349
  %395 = vmatprep.subr.mxu0 0.0
  %396 = vmatpush1.msra.mxu0 0.0
  %397 = vmatprep.subr.mxu0 0.0
  %398 = vmatpush1.msra.mxu0 0.0
  %399 = vmatprep.subr.mxu0 0.0
  %400 = vmatpush1.msra.mxu0 0.0
  %401 = vmatprep.subr.mxu0 0.0
  %402 = vmatpush1.msra.mxu0 0.0
  %403 = vmatprep.subr.mxu0 0.0
  %404 = vmatpush1.msra.mxu0 0.0
  %405 = vmatprep.subr.mxu0 0.0
  %406 = vmatpush1.msra.mxu0 0.0
  %407 = vmatprep.subr.mxu0 0.0
  %408 = vmatpush1.msra.mxu0 0.0
  %409 = vmatprep.subr.mxu0 0.0
  %410 = vmatpush1.msra.mxu0 0.0
  %411 = vmatprep.subr.mxu0 0.0
  %412 = vmatpush1.msra.mxu0 0.0
  %413 = vmatprep.subr.mxu0 0.0
  %414 = vmatpush1.msra.mxu0 0.0
  %415 = vmatprep.subr.mxu0 0.0
  %416 = vmatpush1.msra.mxu0 0.0
  %417 = vmatprep.subr.mxu0 0.0
  %418 = vmatpush1.msra.mxu0 0.0
  %419 = vmatprep.subr.mxu0 0.0
  %420 = vmatpush1.msra.mxu0 0.0
  %421 = vmatprep.subr.mxu0 0.0
  %422 = vmatpush1.msra.mxu0 0.0
  %423 = vmatprep.subr.mxu0 0.0
  %424 = vmatpush1.msra.mxu0 0.0
  %425 = vmatprep.subr.mxu0 0.0
  %426 = vmatpush1.msra.mxu0 0.0
  %427 = vmatprep.mubr.f32.mxu0 0.0
  %428 = vmatmul.mubr.f32.gmra.mrb[0].mxu0 %v303
  %v429 = vpop.f32.mrb[0].mxu0
  %v430 = vadd.f32 %v356, %v429
  %v431 = vpop.f32.mrb[0].mxu0
  %v432 = vadd.f32 %v360, %v431
  %433 = vmatprep.mubr.f32.mxu0 0.0
  %434 = vmatmul.mubr.f32.gmra.mrb[0].mxu0 %v304
  %v435 = vpop.f32.mrb[0].mxu0
  %v436 = vadd.f32 %v356, %v435
  %v437 = vpop.f32.mrb[0].mxu0
  %v438 = vadd.f32 %v360, %v437
  %439 = vmatprep.mubr.f32.mxu0 0.0
  %440 = vmatmul.mubr.f32.gmra.mrb[0].mxu0 %v305
  %v441 = vpop.f32.mrb[0].mxu0
  %v442 = vadd.f32 %v356, %v441
  %v443 = vpop.f32.mrb[0].mxu0
  %v444 = vadd.f32 %v360, %v443
  %445 = vmatprep.mubr.f32.mxu0 0.0
  %446 = vmatmul.mubr.f32.gmra.mrb[0].mxu0 %v306
  %v447 = vpop.f32.mrb[0].mxu0
  %v448 = vadd.f32 %v356, %v447
  %v449 = vpop.f32.mrb[0].mxu0
  %v450 = vadd.f32 %v360, %v449
  %451 = vmatprep.mubr.f32.mxu0 0.0
  %452 = vmatmul.mubr.f32.gmra.mrb[0].mxu0 %v307
  %v453 = vpop.f32.mrb[0].mxu0
  %v454 = vadd.f32 %v356, %v453
  %v455 = vpop.f32.mrb[0].mxu0
  %v456 = vadd.f32 %v360, %v455
  %457 = vmatprep.mubr.f32.mxu0 0.0
  %458 = vmatmul.mubr.f32.gmra.mrb[0].mxu0 %v308
  %v459 = vpop.f32.mrb[0].mxu0
  %v460 = vadd.f32 %v356, %v459
  %v461 = vpop.f32.mrb[0].mxu0
  %v462 = vadd.f32 %v360, %v461
  %463 = vmatprep.mubr.f32.mxu0 0.0
  %464 = vmatmul.mubr.f32.gmra.mrb[0].mxu0 %v309
  %v465 = vpop.f32.mrb[0].mxu0
  %v466 = vadd.f32 %v356, %v465
  %v467 = vpop.f32.mrb[0].mxu0
  %v468 = vadd.f32 %v360, %v467
  %469 = vmatprep.mubr.f32.mxu0 0.0
  %470 = vmatmul.mubr.f32.gmra.mrb[0].mxu0 %v310
  %v471 = vpop.f32.mrb[0].mxu0
  %v472 = vadd.f32 %v356, %v471
  %v473 = vpop.f32.mrb[0].mxu0
  %v474 = vadd.f32 %v360, %v473
  %475 = vmatprep.mubr.f32.mxu0 0.0
  %476 = vmatmul.mubr.f32.gmra.mrb[0].mxu0 %v311
  %v477 = vpop.f32.mrb[0].mxu0
  %v478 = vadd.f32 %v356, %v477
  %v479 = vpop.f32.mrb[0].mxu0
  %v480 = vadd.f32 %v360, %v479
  %481 = vmatprep.mubr.f32.mxu0 0.0
  %482 = vmatmul.mubr.f32.gmra.mrb[0].mxu0 %v312
  %v483 = vpop.f32.mrb[0].mxu0
  %v484 = vadd.f32 %v356, %v483
  %v485 = vpop.f32.mrb[0].mxu0
  %v486 = vadd.f32 %v360, %v485
  %487 = vmatprep.mubr.f32.mxu0 0.0
  %488 = vmatmul.mubr.f32.gmra.mrb[0].mxu0 %v313
  %v489 = vpop.f32.mrb[0].mxu0
  %v490 = vadd.f32 %v356, %v489
  %v491 = vpop.f32.mrb[0].mxu0
  %v492 = vadd.f32 %v360, %v491
  %493 = vmatprep.mubr.f32.mxu0 0.0
  %494 = vmatmul.mubr.f32.gmra.mrb[0].mxu0 %v314
  %v495 = vpop.f32.mrb[0].mxu0
  %v496 = vadd.f32 %v356, %v495
  %v497 = vpop.f32.mrb[0].mxu0
  %v498 = vadd.f32 %v360, %v497
  %499 = vmatprep.mubr.f32.mxu0 0.0
  %500 = vmatmul.mubr.f32.gmra.mrb[0].mxu0 %v315
  %v501 = vpop.f32.mrb[0].mxu0
  %v502 = vadd.f32 %v356, %v501
  %v503 = vpop.f32.mrb[0].mxu0
  %v504 = vadd.f32 %v360, %v503
  %505 = vmatprep.mubr.f32.mxu0 0.0
  %506 = vmatmul.mubr.f32.gmra.mrb[0].mxu0 %v316
  %v507 = vpop.f32.mrb[0].mxu0
  %v508 = vadd.f32 %v356, %v507
  %v509 = vpop.f32.mrb[0].mxu0
  %v510 = vadd.f32 %v360, %v509
  %511 = vmatprep.mubr.f32.mxu0 0.0
  %512 = vmatmul.mubr.f32.gmra.mrb[0].mxu0 %v317
  %v513 = vpop.f32.mrb[0].mxu0
  %v514 = vadd.f32 %v356, %v513
  %v515 = vpop.f32.mrb[0].mxu0
  %v516 = vadd.f32 %v360, %v515
  %517 = vmatprep.mubr.f32.mxu0 0.0
  %518 = vmatmul.mubr.f32.gmra.mrb[0].mxu0 %v318
  %v519 = vpop.f32.mrb[0].mxu0
  %v520 = vadd.f32 %v356, %v519
  %v521 = vpop.f32.mrb[0].mxu0
  %v522 = vadd.f32 %v360, %v521
  %523 = vdwg.mxu0
  %v524 = vmax.f32 %v430, 0.0
  %v525 = vmax.f32 %v432, 0.0
  %v526 = vmax.f32 %v436, 0.0
  %v527 = vmax.f32 %v438, 0.0
  %v528 = vmax.f32 %v442, 0.0
  %v529 = vmax.f32 %v444, 0.0
  %v530 = vmax.f32 %v448, 0.0
  %v531 = vmax.f32 %v450, 0.0
  %v532 = vmax.f32 %v454, 0.0
  %v533 = vmax.f32 %v456, 0.0
  %v534 = vmax.f32 %v460, 0.0
  %v535 = vmax.f32 %v462, 0.0
  %v536 = vmax.f32 %v466, 0.0
  %v537 = vmax.f32 %v468, 0.0
  %v538 = vmax.f32 %v472, 0.0
  %v539 = vmax.f32 %v474, 0.0
  %v540 = vmax.f32 %v478, 0.0
  %v541 = vmax.f32 %v480, 0.0
  %v542 = vmax.f32 %v484, 0.0
  %v543 = vmax.f32 %v486, 0.0
  %v544 = vmax.f32 %v490, 0.0
  %v545 = vmax.f32 %v492, 0.0
  %v546 = vmax.f32 %v496, 0.0
  %v547 = vmax.f32 %v498, 0.0
  %v548 = vmax.f32 %v502, 0.0
  %v549 = vmax.f32 %v504, 0.0
  %v550 = vmax.f32 %v508, 0.0
  %v551 = vmax.f32 %v510, 0.0
  %v552 = vmax.f32 %v514, 0.0
  %v553 = vmax.f32 %v516, 0.0
  %v554 = vmax.f32 %v520, 0.0
  %v555 = vmax.f32 %v522, 0.0
  %v556 = vld [vmem:[%s6] sm:$0xff]
  %v557 = vld [vmem:[%s6 + $0x8] sm:$0xff]
  %v558 = vld [vmem:[%s6 + $0x10] sm:$0xff]
  %v559 = vld [vmem:[%s6 + $0x18] sm:$0xff]
  %v560 = vld [vmem:[%s6 + $0x20] sm:$0xff]
  %v561 = vld [vmem:[%s6 + $0x28] sm:$0xff]
  %v562 = vld [vmem:[%s6 + $0x30] sm:$0xff]
  %v563 = vld [vmem:[%s6 + $0x38] sm:$0xff]
  %v564 = vld [vmem:[%s6 + $0x40] sm:$0xff]
  %v565 = vld [vmem:[%s6 + $0x48] sm:$0xff]
  %v566 = vld [vmem:[%s6 + $0x50] sm:$0xff]
  %v567 = vld [vmem:[%s6 + $0x58] sm:$0xff]
  %v568 = vld [vmem:[%s6 + $0x60] sm:$0xff]
  %v569 = vld [vmem:[%s6 + $0x68] sm:$0xff]
  %v570 = vld [vmem:[%s6 + $0x70] sm:$0xff]
  %v571 = vld [vmem:[%s6 + $0x78] sm:$0xff]
  %v572 = vld [vmem:[%s7] sm:$0x1]
  %v574 = vlaneseq
  %v575 = vshrl.u32 %v574, 7
  %v576 = vsub.s32 0, %v575
  %v577 = vrot.slane %v572, %v576
  %579 = vmatprep.subr.mxu0 0.0
  %580 = vmatpush1.msra.mxu0 %v556
  %581 = vmatprep.subr.mxu0 0.0
  %582 = vmatpush1.msra.mxu0 %v557
  %583 = vmatprep.subr.mxu0 0.0
  %584 = vmatpush1.msra.mxu0 %v558
  %585 = vmatprep.subr.mxu0 0.0
  %586 = vmatpush1.msra.mxu0 %v559
  %587 = vmatprep.subr.mxu0 0.0
  %588 = vmatpush1.msra.mxu0 %v560
  %589 = vmatprep.subr.mxu0 0.0
  %590 = vmatpush1.msra.mxu0 %v561
  %591 = vmatprep.subr.mxu0 0.0
  %592 = vmatpush1.msra.mxu0 %v562
  %593 = vmatprep.subr.mxu0 0.0
  %594 = vmatpush1.msra.mxu0 %v563
  %595 = vmatprep.subr.mxu0 0.0
  %596 = vmatpush1.msra.mxu0 %v564
  %597 = vmatprep.subr.mxu0 0.0
  %598 = vmatpush1.msra.mxu0 %v565
  %599 = vmatprep.subr.mxu0 0.0
  %600 = vmatpush1.msra.mxu0 %v566
  %601 = vmatprep.subr.mxu0 0.0
  %602 = vmatpush1.msra.mxu0 %v567
  %603 = vmatprep.subr.mxu0 0.0
  %604 = vmatpush1.msra.mxu0 %v568
  %605 = vmatprep.subr.mxu0 0.0
  %606 = vmatpush1.msra.mxu0 %v569
  %607 = vmatprep.subr.mxu0 0.0
  %608 = vmatpush1.msra.mxu0 %v570
  %609 = vmatprep.subr.mxu0 0.0
  %610 = vmatpush1.msra.mxu0 %v571
  %611 = vmatprep.subr.mxu0 0.0
  %612 = vmatpush1.msra.mxu0 0.0
  %613 = vmatprep.subr.mxu0 0.0
  %614 = vmatpush1.msra.mxu0 0.0
  %615 = vmatprep.subr.mxu0 0.0
  %616 = vmatpush1.msra.mxu0 0.0
  %617 = vmatprep.subr.mxu0 0.0
  %618 = vmatpush1.msra.mxu0 0.0
  %619 = vmatprep.subr.mxu0 0.0
  %620 = vmatpush1.msra.mxu0 0.0
  %621 = vmatprep.subr.mxu0 0.0
  %622 = vmatpush1.msra.mxu0 0.0
  %623 = vmatprep.subr.mxu0 0.0
  %624 = vmatpush1.msra.mxu0 0.0
  %625 = vmatprep.subr.mxu0 0.0
  %626 = vmatpush1.msra.mxu0 0.0
  %627 = vmatprep.subr.mxu0 0.0
  %628 = vmatpush1.msra.mxu0 0.0
  %629 = vmatprep.subr.mxu0 0.0
  %630 = vmatpush1.msra.mxu0 0.0
  %631 = vmatprep.subr.mxu0 0.0
  %632 = vmatpush1.msra.mxu0 0.0
  %633 = vmatprep.subr.mxu0 0.0
  %634 = vmatpush1.msra.mxu0 0.0
  %635 = vmatprep.subr.mxu0 0.0
  %636 = vmatpush1.msra.mxu0 0.0
  %637 = vmatprep.subr.mxu0 0.0
  %638 = vmatpush1.msra.mxu0 0.0
  %639 = vmatprep.subr.mxu0 0.0
  %640 = vmatpush1.msra.mxu0 0.0
  %641 = vmatprep.subr.mxu0 0.0
  %642 = vmatpush1.msra.mxu0 0.0
  %643 = vmatprep.mubr.f32.mxu0 0.0
  %644 = vmatmul.mubr.f32.gmra.mrb[0].mxu0 %v524
  %v645 = vpop.f32.mrb[0].mxu0
  %v646 = vadd.f32 %v577, %v645
  %v647 = vpop.f32.mrb[0].mxu0
  %648 = vmatprep.mubr.f32.mxu0 0.0
  %649 = vmatmul.mubr.f32.gmra.mrb[0].mxu0 %v526
  %v650 = vpop.f32.mrb[0].mxu0
  %v651 = vadd.f32 %v577, %v650
  %v652 = vpop.f32.mrb[0].mxu0
  %653 = vmatprep.mubr.f32.mxu0 0.0
  %654 = vmatmul.mubr.f32.gmra.mrb[0].mxu0 %v528
  %v655 = vpop.f32.mrb[0].mxu0
  %v656 = vadd.f32 %v577, %v655
  %v657 = vpop.f32.mrb[0].mxu0
  %658 = vmatprep.mubr.f32.mxu0 0.0
  %659 = vmatmul.mubr.f32.gmra.mrb[0].mxu0 %v530
  %v660 = vpop.f32.mrb[0].mxu0
  %v661 = vadd.f32 %v577, %v660
  %v662 = vpop.f32.mrb[0].mxu0
  %663 = vmatprep.mubr.f32.mxu0 0.0
  %664 = vmatmul.mubr.f32.gmra.mrb[0].mxu0 %v532
  %v665 = vpop.f32.mrb[0].mxu0
  %v666 = vadd.f32 %v577, %v665
  %v667 = vpop.f32.mrb[0].mxu0
  %668 = vmatprep.mubr.f32.mxu0 0.0
  %669 = vmatmul.mubr.f32.gmra.mrb[0].mxu0 %v534
  %v670 = vpop.f32.mrb[0].mxu0
  %v671 = vadd.f32 %v577, %v670
  %v672 = vpop.f32.mrb[0].mxu0
  %673 = vmatprep.mubr.f32.mxu0 0.0
  %674 = vmatmul.mubr.f32.gmra.mrb[0].mxu0 %v536
  %v675 = vpop.f32.mrb[0].mxu0
  %v676 = vadd.f32 %v577, %v675
  %v677 = vpop.f32.mrb[0].mxu0
  %678 = vmatprep.mubr.f32.mxu0 0.0
  %679 = vmatmul.mubr.f32.gmra.mrb[0].mxu0 %v538
  %v680 = vpop.f32.mrb[0].mxu0
  %v681 = vadd.f32 %v577, %v680
  %v682 = vpop.f32.mrb[0].mxu0
  %683 = vmatprep.mubr.f32.mxu0 0.0
  %684 = vmatmul.mubr.f32.gmra.mrb[0].mxu0 %v540
  %v685 = vpop.f32.mrb[0].mxu0
  %v686 = vadd.f32 %v577, %v685
  %v687 = vpop.f32.mrb[0].mxu0
  %688 = vmatprep.mubr.f32.mxu0 0.0
  %689 = vmatmul.mubr.f32.gmra.mrb[0].mxu0 %v542
  %v690 = vpop.f32.mrb[0].mxu0
  %v691 = vadd.f32 %v577, %v690
  %v692 = vpop.f32.mrb[0].mxu0
  %693 = vmatprep.mubr.f32.mxu0 0.0
  %694 = vmatmul.mubr.f32.gmra.mrb[0].mxu0 %v544
  %v695 = vpop.f32.mrb[0].mxu0
  %v696 = vadd.f32 %v577, %v695
  %v697 = vpop.f32.mrb[0].mxu0
  %698 = vmatprep.mubr.f32.mxu0 0.0
  %699 = vmatmul.mubr.f32.gmra.mrb[0].mxu0 %v546
  %v700 = vpop.f32.mrb[0].mxu0
  %v701 = vadd.f32 %v577, %v700
  %v702 = vpop.f32.mrb[0].mxu0
  %703 = vmatprep.mubr.f32.mxu0 0.0
  %704 = vmatmul.mubr.f32.gmra.mrb[0].mxu0 %v548
  %v705 = vpop.f32.mrb[0].mxu0
  %v706 = vadd.f32 %v577, %v705
  %v707 = vpop.f32.mrb[0].mxu0
  %708 = vmatprep.mubr.f32.mxu0 0.0
  %709 = vmatmul.mubr.f32.gmra.mrb[0].mxu0 %v550
  %v710 = vpop.f32.mrb[0].mxu0
  %v711 = vadd.f32 %v577, %v710
  %v712 = vpop.f32.mrb[0].mxu0
  %713 = vmatprep.mubr.f32.mxu0 0.0
  %714 = vmatmul.mubr.f32.gmra.mrb[0].mxu0 %v552
  %v715 = vpop.f32.mrb[0].mxu0
  %v716 = vadd.f32 %v577, %v715
  %v717 = vpop.f32.mrb[0].mxu0
  %718 = vmatprep.mubr.f32.mxu0 0.0
  %719 = vmatmul.mubr.f32.gmra.mrb[0].mxu0 %v554
  %v720 = vpop.f32.mrb[0].mxu0
  %v721 = vadd.f32 %v577, %v720
  %v722 = vpop.f32.mrb[0].mxu0
  %723 = vdwg.mxu0
  %s724 = scalar_lea.vmem %s6, 128
  %v725 = vld [vmem:[%s724] sm:$0xff]
  %v726 = vld [vmem:[%s724 + $0x8] sm:$0xff]
  %v727 = vld [vmem:[%s724 + $0x10] sm:$0xff]
  %v728 = vld [vmem:[%s724 + $0x18] sm:$0xff]
  %v729 = vld [vmem:[%s724 + $0x20] sm:$0xff]
  %v730 = vld [vmem:[%s724 + $0x28] sm:$0xff]
  %v731 = vld [vmem:[%s724 + $0x30] sm:$0xff]
  %v732 = vld [vmem:[%s724 + $0x38] sm:$0xff]
  %v733 = vld [vmem:[%s724 + $0x40] sm:$0xff]
  %v734 = vld [vmem:[%s724 + $0x48] sm:$0xff]
  %v735 = vld [vmem:[%s724 + $0x50] sm:$0xff]
  %v736 = vld [vmem:[%s724 + $0x58] sm:$0xff]
  %v737 = vld [vmem:[%s724 + $0x60] sm:$0xff]
  %v738 = vld [vmem:[%s724 + $0x68] sm:$0xff]
  %v739 = vld [vmem:[%s724 + $0x70] sm:$0xff]
  %v740 = vld [vmem:[%s724 + $0x78] sm:$0xff]
  %s741 = scalar_lea.vmem %s7, 1
  %v742 = vld [vmem:[%s741] sm:$0x1]
  %v744 = vlaneseq
  %v745 = vshrl.u32 %v744, 7
  %v746 = vsub.s32 0, %v745
  %v747 = vrot.slane %v742, %v746
  %749 = vmatprep.subr.mxu0 0.0
  %750 = vmatpush1.msra.mxu0 %v725
  %751 = vmatprep.subr.mxu0 0.0
  %752 = vmatpush1.msra.mxu0 %v726
  %753 = vmatprep.subr.mxu0 0.0
  %754 = vmatpush1.msra.mxu0 %v727
  %755 = vmatprep.subr.mxu0 0.0
  %756 = vmatpush1.msra.mxu0 %v728
  %757 = vmatprep.subr.mxu0 0.0
  %758 = vmatpush1.msra.mxu0 %v729
  %759 = vmatprep.subr.mxu0 0.0
  %760 = vmatpush1.msra.mxu0 %v730
  %761 = vmatprep.subr.mxu0 0.0
  %762 = vmatpush1.msra.mxu0 %v731
  %763 = vmatprep.subr.mxu0 0.0
  %764 = vmatpush1.msra.mxu0 %v732
  %765 = vmatprep.subr.mxu0 0.0
  %766 = vmatpush1.msra.mxu0 %v733
  %767 = vmatprep.subr.mxu0 0.0
  %768 = vmatpush1.msra.mxu0 %v734
  %769 = vmatprep.subr.mxu0 0.0
  %770 = vmatpush1.msra.mxu0 %v735
  %771 = vmatprep.subr.mxu0 0.0
  %772 = vmatpush1.msra.mxu0 %v736
  %773 = vmatprep.subr.mxu0 0.0
  %774 = vmatpush1.msra.mxu0 %v737
  %775 = vmatprep.subr.mxu0 0.0
  %776 = vmatpush1.msra.mxu0 %v738
  %777 = vmatprep.subr.mxu0 0.0
  %778 = vmatpush1.msra.mxu0 %v739
  %779 = vmatprep.subr.mxu0 0.0
  %780 = vmatpush1.msra.mxu0 %v740
  %781 = vmatprep.subr.mxu0 0.0
  %782 = vmatpush1.msra.mxu0 0.0
  %783 = vmatprep.subr.mxu0 0.0
  %784 = vmatpush1.msra.mxu0 0.0
  %785 = vmatprep.subr.mxu0 0.0
  %786 = vmatpush1.msra.mxu0 0.0
  %787 = vmatprep.subr.mxu0 0.0
  %788 = vmatpush1.msra.mxu0 0.0
  %789 = vmatprep.subr.mxu0 0.0
  %790 = vmatpush1.msra.mxu0 0.0
  %791 = vmatprep.subr.mxu0 0.0
  %792 = vmatpush1.msra.mxu0 0.0
  %793 = vmatprep.subr.mxu0 0.0
  %794 = vmatpush1.msra.mxu0 0.0
  %795 = vmatprep.subr.mxu0 0.0
  %796 = vmatpush1.msra.mxu0 0.0
  %797 = vmatprep.subr.mxu0 0.0
  %798 = vmatpush1.msra.mxu0 0.0
  %799 = vmatprep.subr.mxu0 0.0
  %800 = vmatpush1.msra.mxu0 0.0
  %801 = vmatprep.subr.mxu0 0.0
  %802 = vmatpush1.msra.mxu0 0.0
  %803 = vmatprep.subr.mxu0 0.0
  %804 = vmatpush1.msra.mxu0 0.0
  %805 = vmatprep.subr.mxu0 0.0
  %806 = vmatpush1.msra.mxu0 0.0
  %807 = vmatprep.subr.mxu0 0.0
  %808 = vmatpush1.msra.mxu0 0.0
  %809 = vmatprep.subr.mxu0 0.0
  %810 = vmatpush1.msra.mxu0 0.0
  %811 = vmatprep.subr.mxu0 0.0
  %812 = vmatpush1.msra.mxu0 0.0
  %813 = vmatprep.mubr.f32.mxu0 0.0
  %814 = vmatmul.mubr.f32.gmra.mrb[0].mxu0 %v525
  %v815 = vpop.f32.mrb[0].mxu0
  %v816 = vadd.f32 %v747, %v815
  %v817 = vpop.f32.mrb[0].mxu0
  %818 = vmatprep.mubr.f32.mxu0 0.0
  %819 = vmatmul.mubr.f32.gmra.mrb[0].mxu0 %v527
  %v820 = vpop.f32.mrb[0].mxu0
  %v821 = vadd.f32 %v747, %v820
  %v822 = vpop.f32.mrb[0].mxu0
  %823 = vmatprep.mubr.f32.mxu0 0.0
  %824 = vmatmul.mubr.f32.gmra.mrb[0].mxu0 %v529
  %v825 = vpop.f32.mrb[0].mxu0
  %v826 = vadd.f32 %v747, %v825
  %v827 = vpop.f32.mrb[0].mxu0
  %828 = vmatprep.mubr.f32.mxu0 0.0
  %829 = vmatmul.mubr.f32.gmra.mrb[0].mxu0 %v531
  %v830 = vpop.f32.mrb[0].mxu0
  %v831 = vadd.f32 %v747, %v830
  %v832 = vpop.f32.mrb[0].mxu0
  %833 = vmatprep.mubr.f32.mxu0 0.0
  %834 = vmatmul.mubr.f32.gmra.mrb[0].mxu0 %v533
  %v835 = vpop.f32.mrb[0].mxu0
  %v836 = vadd.f32 %v747, %v835
  %v837 = vpop.f32.mrb[0].mxu0
  %838 = vmatprep.mubr.f32.mxu0 0.0
  %839 = vmatmul.mubr.f32.gmra.mrb[0].mxu0 %v535
  %v840 = vpop.f32.mrb[0].mxu0
  %v841 = vadd.f32 %v747, %v840
  %v842 = vpop.f32.mrb[0].mxu0
  %843 = vmatprep.mubr.f32.mxu0 0.0
  %844 = vmatmul.mubr.f32.gmra.mrb[0].mxu0 %v537
  %v845 = vpop.f32.mrb[0].mxu0
  %v846 = vadd.f32 %v747, %v845
  %v847 = vpop.f32.mrb[0].mxu0
  %848 = vmatprep.mubr.f32.mxu0 0.0
  %849 = vmatmul.mubr.f32.gmra.mrb[0].mxu0 %v539
  %v850 = vpop.f32.mrb[0].mxu0
  %v851 = vadd.f32 %v747, %v850
  %v852 = vpop.f32.mrb[0].mxu0
  %853 = vmatprep.mubr.f32.mxu0 0.0
  %854 = vmatmul.mubr.f32.gmra.mrb[0].mxu0 %v541
  %v855 = vpop.f32.mrb[0].mxu0
  %v856 = vadd.f32 %v747, %v855
  %v857 = vpop.f32.mrb[0].mxu0
  %858 = vmatprep.mubr.f32.mxu0 0.0
  %859 = vmatmul.mubr.f32.gmra.mrb[0].mxu0 %v543
  %v860 = vpop.f32.mrb[0].mxu0
  %v861 = vadd.f32 %v747, %v860
  %v862 = vpop.f32.mrb[0].mxu0
  %863 = vmatprep.mubr.f32.mxu0 0.0
  %864 = vmatmul.mubr.f32.gmra.mrb[0].mxu0 %v545
  %v865 = vpop.f32.mrb[0].mxu0
  %v866 = vadd.f32 %v747, %v865
  %v867 = vpop.f32.mrb[0].mxu0
  %868 = vmatprep.mubr.f32.mxu0 0.0
  %869 = vmatmul.mubr.f32.gmra.mrb[0].mxu0 %v547
  %v870 = vpop.f32.mrb[0].mxu0
  %v871 = vadd.f32 %v747, %v870
  %v872 = vpop.f32.mrb[0].mxu0
  %873 = vmatprep.mubr.f32.mxu0 0.0
  %874 = vmatmul.mubr.f32.gmra.mrb[0].mxu0 %v549
  %v875 = vpop.f32.mrb[0].mxu0
  %v876 = vadd.f32 %v747, %v875
  %v877 = vpop.f32.mrb[0].mxu0
  %878 = vmatprep.mubr.f32.mxu0 0.0
  %879 = vmatmul.mubr.f32.gmra.mrb[0].mxu0 %v551
  %v880 = vpop.f32.mrb[0].mxu0
  %v881 = vadd.f32 %v747, %v880
  %v882 = vpop.f32.mrb[0].mxu0
  %883 = vmatprep.mubr.f32.mxu0 0.0
  %884 = vmatmul.mubr.f32.gmra.mrb[0].mxu0 %v553
  %v885 = vpop.f32.mrb[0].mxu0
  %v886 = vadd.f32 %v747, %v885
  %v887 = vpop.f32.mrb[0].mxu0
  %888 = vmatprep.mubr.f32.mxu0 0.0
  %889 = vmatmul.mubr.f32.gmra.mrb[0].mxu0 %v555
  %v890 = vpop.f32.mrb[0].mxu0
  %v891 = vadd.f32 %v747, %v890
  %v892 = vpop.f32.mrb[0].mxu0
  %893 = vdwg.mxu0
  %v894 = vlaneseq
  %v895 = vshrl.u32 %v894, 7
  %v896 = vadd.s32 %v895, 8
  %v897 = vadd.s32 %v895, 16
  %v898 = vadd.s32 %v895, 24
  %v899 = vadd.s32 %v895, 32
  %v900 = vadd.s32 %v895, 40
  %v901 = vadd.s32 %v895, 48
  %v902 = vadd.s32 %v895, 56
  %v903 = vadd.s32 %v895, 64
  %v904 = vadd.s32 %v895, 72
  %v905 = vadd.s32 %v895, 80
  %v906 = vadd.s32 %v895, 88
  %v907 = vadd.s32 %v895, 96
  %v908 = vadd.s32 %v895, 104
  %v909 = vadd.s32 %v895, 112
  %v910 = vadd.s32 %v895, 120
  %vm911 = vcmp.lt.s32.totalorder %v895, 16
  %vm912 = vcmp.lt.s32.totalorder %v896, 16
  %vm913 = vcmp.lt.s32.totalorder %v897, 16
  %vm914 = vcmp.lt.s32.totalorder %v898, 16
  %vm915 = vcmp.lt.s32.totalorder %v899, 16
  %vm916 = vcmp.lt.s32.totalorder %v900, 16
  %vm917 = vcmp.lt.s32.totalorder %v901, 16
  %vm918 = vcmp.lt.s32.totalorder %v902, 16
  %vm919 = vcmp.lt.s32.totalorder %v903, 16
  %vm920 = vcmp.lt.s32.totalorder %v904, 16
  %vm921 = vcmp.lt.s32.totalorder %v905, 16
  %vm922 = vcmp.lt.s32.totalorder %v906, 16
  %vm923 = vcmp.lt.s32.totalorder %v907, 16
  %vm924 = vcmp.lt.s32.totalorder %v908, 16
  %vm925 = vcmp.lt.s32.totalorder %v909, 16
  %vm926 = vcmp.lt.s32.totalorder %v910, 16
  %v927 = vsel %vm911, %v816, 0.0
  %v928 = vsel %vm912, %v821, 0.0
  %v929 = vsel %vm913, %v826, 0.0
  %v930 = vsel %vm914, %v831, 0.0
  %v931 = vsel %vm915, %v836, 0.0
  %v932 = vsel %vm916, %v841, 0.0
  %v933 = vsel %vm917, %v846, 0.0
  %v934 = vsel %vm918, %v851, 0.0
  %v935 = vsel %vm919, %v856, 0.0
  %v936 = vsel %vm920, %v861, 0.0
  %v937 = vsel %vm921, %v866, 0.0
  %v938 = vsel %vm922, %v871, 0.0
  %v939 = vsel %vm923, %v876, 0.0
  %v940 = vsel %vm924, %v881, 0.0
  %v941 = vsel %vm925, %v886, 0.0
  %v942 = vsel %vm926, %v891, 0.0
  %943 = vmatprep.subr.mxu0 0.0
  %944 = vmatpush1.xpose.msra.mxu0 %v646
  %945 = vmatprep.subr.mxu0 0.0
  %946 = vmatpush1.xpose.msra.mxu0 %v651
  %947 = vmatprep.subr.mxu0 0.0
  %948 = vmatpush1.xpose.msra.mxu0 %v656
  %949 = vmatprep.subr.mxu0 0.0
  %950 = vmatpush1.xpose.msra.mxu0 %v661
  %951 = vmatprep.subr.mxu0 0.0
  %952 = vmatpush1.xpose.msra.mxu0 %v666
  %953 = vmatprep.subr.mxu0 0.0
  %954 = vmatpush1.xpose.msra.mxu0 %v671
  %955 = vmatprep.subr.mxu0 0.0
  %956 = vmatpush1.xpose.msra.mxu0 %v676
  %957 = vmatprep.subr.mxu0 0.0
  %958 = vmatpush1.xpose.msra.mxu0 %v681
  %959 = vmatprep.subr.mxu0 0.0
  %960 = vmatpush1.xpose.msra.mxu0 %v686
  %961 = vmatprep.subr.mxu0 0.0
  %962 = vmatpush1.xpose.msra.mxu0 %v691
  %963 = vmatprep.subr.mxu0 0.0
  %964 = vmatpush1.xpose.msra.mxu0 %v696
  %965 = vmatprep.subr.mxu0 0.0
  %966 = vmatpush1.xpose.msra.mxu0 %v701
  %967 = vmatprep.subr.mxu0 0.0
  %968 = vmatpush1.xpose.msra.mxu0 %v706
  %969 = vmatprep.subr.mxu0 0.0
  %970 = vmatpush1.xpose.msra.mxu0 %v711
  %971 = vmatprep.subr.mxu0 0.0
  %972 = vmatpush1.xpose.msra.mxu0 %v716
  %973 = vmatprep.subr.mxu0 0.0
  %974 = vmatpush1.xpose.msra.mxu0 %v721
  %975 = vmatprep.subr.mxu0 0.0
  %976 = vmatpush1.xpose.msra.mxu0 0.0
  %977 = vmatprep.subr.mxu0 0.0
  %978 = vmatpush1.xpose.msra.mxu0 0.0
  %979 = vmatprep.subr.mxu0 0.0
  %980 = vmatpush1.xpose.msra.mxu0 0.0
  %981 = vmatprep.subr.mxu0 0.0
  %982 = vmatpush1.xpose.msra.mxu0 0.0
  %983 = vmatprep.subr.mxu0 0.0
  %984 = vmatpush1.xpose.msra.mxu0 0.0
  %985 = vmatprep.subr.mxu0 0.0
  %986 = vmatpush1.xpose.msra.mxu0 0.0
  %987 = vmatprep.subr.mxu0 0.0
  %988 = vmatpush1.xpose.msra.mxu0 0.0
  %989 = vmatprep.subr.mxu0 0.0
  %990 = vmatpush1.xpose.msra.mxu0 0.0
  %991 = vmatprep.subr.mxu0 0.0
  %992 = vmatpush1.xpose.msra.mxu0 0.0
  %993 = vmatprep.subr.mxu0 0.0
  %994 = vmatpush1.xpose.msra.mxu0 0.0
  %995 = vmatprep.subr.mxu0 0.0
  %996 = vmatpush1.xpose.msra.mxu0 0.0
  %997 = vmatprep.subr.mxu0 0.0
  %998 = vmatpush1.xpose.msra.mxu0 0.0
  %999 = vmatprep.subr.mxu0 0.0
  %1000 = vmatpush1.xpose.msra.mxu0 0.0
  %1001 = vmatprep.subr.mxu0 0.0
  %1002 = vmatpush1.xpose.msra.mxu0 0.0
  %1003 = vmatprep.subr.mxu0 0.0
  %1004 = vmatpush1.xpose.msra.mxu0 0.0
  %1005 = vmatprep.subr.mxu0 0.0
  %1006 = vmatpush1.xpose.msra.mxu0 0.0
  %1007 = vmatprep.mubr.f32.mxu0 0.0
  %1008 = vmatmul.mubr.f32.gmra.mrb[0].mxu0 %v265
  %v1009 = vpop.f32.mrb[0].mxu0
  %v1010 = vadd.f32 0.0, %v1009
  %v1011 = vpop.f32.mrb[0].mxu0
  %1012 = vmatprep.mubr.f32.mxu0 0.0
  %1013 = vmatmul.mubr.f32.gmra.mrb[0].mxu0 %v270
  %v1014 = vpop.f32.mrb[0].mxu0
  %v1015 = vadd.f32 0.0, %v1014
  %v1016 = vpop.f32.mrb[0].mxu0
  %1017 = vmatprep.mubr.f32.mxu0 0.0
  %1018 = vmatmul.mubr.f32.gmra.mrb[0].mxu0 %v275
  %v1019 = vpop.f32.mrb[0].mxu0
  %v1020 = vadd.f32 0.0, %v1019
  %v1021 = vpop.f32.mrb[0].mxu0
  %1022 = vmatprep.mubr.f32.mxu0 0.0
  %1023 = vmatmul.mubr.f32.gmra.mrb[0].mxu0 %v280
  %v1024 = vpop.f32.mrb[0].mxu0
  %v1025 = vadd.f32 0.0, %v1024
  %v1026 = vpop.f32.mrb[0].mxu0
  %1027 = vmatprep.mubr.f32.mxu0 0.0
  %1028 = vmatmul.mubr.f32.gmra.mrb[0].mxu0 %v285
  %v1029 = vpop.f32.mrb[0].mxu0
  %v1030 = vadd.f32 0.0, %v1029
  %v1031 = vpop.f32.mrb[0].mxu0
  %1032 = vmatprep.mubr.f32.mxu0 0.0
  %1033 = vmatmul.mubr.f32.gmra.mrb[0].mxu0 %v290
  %v1034 = vpop.f32.mrb[0].mxu0
  %v1035 = vadd.f32 0.0, %v1034
  %v1036 = vpop.f32.mrb[0].mxu0
  %1037 = vmatprep.mubr.f32.mxu0 0.0
  %1038 = vmatmul.mubr.f32.gmra.mrb[0].mxu0 %v295
  %v1039 = vpop.f32.mrb[0].mxu0
  %v1040 = vadd.f32 0.0, %v1039
  %v1041 = vpop.f32.mrb[0].mxu0
  %1042 = vmatprep.mubr.f32.mxu0 0.0
  %1043 = vmatmul.mubr.f32.gmra.mrb[0].mxu0 %v300
  %v1044 = vpop.f32.mrb[0].mxu0
  %v1045 = vadd.f32 0.0, %v1044
  %v1046 = vpop.f32.mrb[0].mxu0
  %1047 = vdwg.mxu0
  %v1048 = vmul.f32 %v1010, 0.17677669
  %v1049 = vmul.f32 %v1015, 0.17677669
  %v1050 = vmul.f32 %v1020, 0.17677669
  %v1051 = vmul.f32 %v1025, 0.17677669
  %v1052 = vmul.f32 %v1030, 0.17677669
  %v1053 = vmul.f32 %v1035, 0.17677669
  %v1054 = vmul.f32 %v1040, 0.17677669
  %v1055 = vmul.f32 %v1045, 0.17677669
  %1056 = vmatprep.subr.mxu0 0.0
  %1057 = vmatpush1.msra.mxu0 %v927
  %1058 = vmatprep.subr.mxu0 0.0
  %1059 = vmatpush1.msra.mxu0 %v928
  %1060 = vmatprep.subr.mxu0 0.0
  %1061 = vmatpush1.msra.mxu0 %v929
  %1062 = vmatprep.subr.mxu0 0.0
  %1063 = vmatpush1.msra.mxu0 %v930
  %1064 = vmatprep.subr.mxu0 0.0
  %1065 = vmatpush1.msra.mxu0 %v931
  %1066 = vmatprep.subr.mxu0 0.0
  %1067 = vmatpush1.msra.mxu0 %v932
  %1068 = vmatprep.subr.mxu0 0.0
  %1069 = vmatpush1.msra.mxu0 %v933
  %1070 = vmatprep.subr.mxu0 0.0
  %1071 = vmatpush1.msra.mxu0 %v934
  %1072 = vmatprep.subr.mxu0 0.0
  %1073 = vmatpush1.msra.mxu0 %v935
  %1074 = vmatprep.subr.mxu0 0.0
  %1075 = vmatpush1.msra.mxu0 %v936
  %1076 = vmatprep.subr.mxu0 0.0
  %1077 = vmatpush1.msra.mxu0 %v937
  %1078 = vmatprep.subr.mxu0 0.0
  %1079 = vmatpush1.msra.mxu0 %v938
  %1080 = vmatprep.subr.mxu0 0.0
  %1081 = vmatpush1.msra.mxu0 %v939
  %1082 = vmatprep.subr.mxu0 0.0
  %1083 = vmatpush1.msra.mxu0 %v940
  %1084 = vmatprep.subr.mxu0 0.0
  %1085 = vmatpush1.msra.mxu0 %v941
  %1086 = vmatprep.subr.mxu0 0.0
  %1087 = vmatpush1.msra.mxu0 %v942
  %1088 = vmatprep.subr.mxu0 0.0
  %1089 = vmatpush1.msra.mxu0 0.0
  %1090 = vmatprep.subr.mxu0 0.0
  %1091 = vmatpush1.msra.mxu0 0.0
  %1092 = vmatprep.subr.mxu0 0.0
  %1093 = vmatpush1.msra.mxu0 0.0
  %1094 = vmatprep.subr.mxu0 0.0
  %1095 = vmatpush1.msra.mxu0 0.0
  %1096 = vmatprep.subr.mxu0 0.0
  %1097 = vmatpush1.msra.mxu0 0.0
  %1098 = vmatprep.subr.mxu0 0.0
  %1099 = vmatpush1.msra.mxu0 0.0
  %1100 = vmatprep.subr.mxu0 0.0
  %1101 = vmatpush1.msra.mxu0 0.0
  %1102 = vmatprep.subr.mxu0 0.0
  %1103 = vmatpush1.msra.mxu0 0.0
  %1104 = vmatprep.subr.mxu0 0.0
  %1105 = vmatpush1.msra.mxu0 0.0
  %1106 = vmatprep.subr.mxu0 0.0
  %1107 = vmatpush1.msra.mxu0 0.0
  %1108 = vmatprep.subr.mxu0 0.0
  %1109 = vmatpush1.msra.mxu0 0.0
  %1110 = vmatprep.subr.mxu0 0.0
  %1111 = vmatpush1.msra.mxu0 0.0
  %1112 = vmatprep.subr.mxu0 0.0
  %1113 = vmatpush1.msra.mxu0 0.0
  %1114 = vmatprep.subr.mxu0 0.0
  %1115 = vmatpush1.msra.mxu0 0.0
  %1116 = vmatprep.subr.mxu0 0.0
  %1117 = vmatpush1.msra.mxu0 0.0
  %1118 = vmatprep.subr.mxu0 0.0
  %1119 = vmatpush1.msra.mxu0 0.0
  %1120 = vmatprep.mubr.f32.mxu0 0.0
  %1121 = vmatmul.mubr.f32.gmra.mrb[0].mxu0 %v1048
  %v1122 = vpop.f32.mrb[0].mxu0
  %v1123 = vadd.f32 0.0, %v1122
  %v1124 = vpop.f32.mrb[0].mxu0
  %1125 = vmatprep.mubr.f32.mxu0 0.0
  %1126 = vmatmul.mubr.f32.gmra.mrb[0].mxu0 %v1049
  %v1127 = vpop.f32.mrb[0].mxu0
  %v1128 = vadd.f32 0.0, %v1127
  %v1129 = vpop.f32.mrb[0].mxu0
  %1130 = vmatprep.mubr.f32.mxu0 0.0
  %1131 = vmatmul.mubr.f32.gmra.mrb[0].mxu0 %v1050
  %v1132 = vpop.f32.mrb[0].mxu0
  %v1133 = vadd.f32 0.0, %v1132
  %v1134 = vpop.f32.mrb[0].mxu0
  %1135 = vmatprep.mubr.f32.mxu0 0.0
  %1136 = vmatmul.mubr.f32.gmra.mrb[0].mxu0 %v1051
  %v1137 = vpop.f32.mrb[0].mxu0
  %v1138 = vadd.f32 0.0, %v1137
  %v1139 = vpop.f32.mrb[0].mxu0
  %1140 = vmatprep.mubr.f32.mxu0 0.0
  %1141 = vmatmul.mubr.f32.gmra.mrb[0].mxu0 %v1052
  %v1142 = vpop.f32.mrb[0].mxu0
  %v1143 = vadd.f32 0.0, %v1142
  %v1144 = vpop.f32.mrb[0].mxu0
  %1145 = vmatprep.mubr.f32.mxu0 0.0
  %1146 = vmatmul.mubr.f32.gmra.mrb[0].mxu0 %v1053
  %v1147 = vpop.f32.mrb[0].mxu0
  %v1148 = vadd.f32 0.0, %v1147
  %v1149 = vpop.f32.mrb[0].mxu0
  %1150 = vmatprep.mubr.f32.mxu0 0.0
  %1151 = vmatmul.mubr.f32.gmra.mrb[0].mxu0 %v1054
  %v1152 = vpop.f32.mrb[0].mxu0
  %v1153 = vadd.f32 0.0, %v1152
  %v1154 = vpop.f32.mrb[0].mxu0
  %1155 = vmatprep.mubr.f32.mxu0 0.0
  %1156 = vmatmul.mubr.f32.gmra.mrb[0].mxu0 %v1055
  %v1157 = vpop.f32.mrb[0].mxu0
  %v1158 = vadd.f32 0.0, %v1157
  %v1159 = vpop.f32.mrb[0].mxu0
  %1160 = vdwg.mxu0
  %1161 = vst [vmem:[%s8] sm:$0xff] %v1123
  %1162 = vst [vmem:[%s8 + $0x10] sm:$0xff] %v1128
  %1163 = vst [vmem:[%s8 + $0x20] sm:$0xff] %v1133
  %1164 = vst [vmem:[%s8 + $0x30] sm:$0xff] %v1138
  %1165 = vst [vmem:[%s8 + $0x40] sm:$0xff] %v1143
  %1166 = vst [vmem:[%s8 + $0x50] sm:$0xff] %v1148
  %1167 = vst [vmem:[%s8 + $0x60] sm:$0xff] %v1153
  %1168 = vst [vmem:[%s8 + $0x70] sm:$0xff] %v1158
  %1169 = vst [vmem:[%s8 + $0x8] sm:$0xff] %v29
  %1170 = vst [vmem:[%s8 + $0x18] sm:$0xff] %v30
  %1171 = vst [vmem:[%s8 + $0x28] sm:$0xff] %v31
  %1172 = vst [vmem:[%s8 + $0x38] sm:$0xff] %v32
  %1173 = vst [vmem:[%s8 + $0x48] sm:$0xff] %v33
  %1174 = vst [vmem:[%s8 + $0x58] sm:$0xff] %v34
  %1175 = vst [vmem:[%s8 + $0x68] sm:$0xff] %v35
  %1176 = vst [vmem:[%s8 + $0x78] sm:$0xff] %v36
  // Predicated region
  $region34: #{global_attention_forward.1} parent=0 // pred_check
    _
  $region35: #{global_attention_forward.1} parent=0 // pred_check_branch
    %1178 = sbr.rel (0) target = $region37
  $region36: #{global_attention_forward.1} parent=0 // pred_region
    _
  $region37: #{global_attention_forward.1} parent=0 // pred_fallthru
    _
  // Predicated region
  $region38: #{global_attention_forward.1} parent=0 // pred_check
    _
  $region39: #{global_attention_forward.1} parent=0 // pred_check_branch
    %1180 = sbr.rel (0) target = $region41
  $region40: #{global_attention_forward.1} parent=0 // pred_region
    _
  $region41: #{global_attention_forward.1} parent=0 // pred_fallthru
    _

</llo_original>
